<compile_context>
chip_gen: v7x
topology: tpu7x:2x2x1
jax: 0.10.0
libtpu: 0.0.40
codegen_flags: <defaults>
</compile_context>

<pallas_src>
import jax
import jax.numpy as jnp
from jax.experimental import pallas as pl
from jax.experimental.pallas import tpu as pltpu


def _eup_has_bf16() -> bool:
    """True on chips whose EUP/VPU have a bf16 path (v6e / v7x)."""
    try:
        kind = jax.devices()[0].device_kind.lower()
    except Exception:
        return False
    return not any(t in kind for t in ("v2", "v3", "v4", "v5"))


def _vmem_limit_bytes() -> int:
    """~3/4 of physical VMEM, capped at 96 MiB (leaves compiler headroom)."""
    try:
        cap = int(pltpu.get_tpu_info().vmem_capacity_bytes)
        return min((cap * 3) // 4, 96 * 1024 * 1024)
    except Exception:
        return 48 * 1024 * 1024


def _make_attention_kernel(q_tile: int, use_bf16_exp: bool):
    def kernel(x_ref, wqkv_ref, wp_ref, bias_ref, o_ref,
               q_s, k_s, v_s, acc_ref):
        h = pl.program_id(1)
        qi = pl.program_id(2)
        last_h = pl.num_programs(1) - 1
        last_q = pl.num_programs(2) - 1
        dh = q_s.shape[-1]

        # Zero the per-batch (N, C) projection accumulator once per b.
        @pl.when((h == 0) & (qi == 0))
        def _():
            acc_ref[...] = jnp.zeros_like(acc_ref)

        # Fused QKV projection once per (b, h): one (N, C) @ (C, 3Dh) matmul,
        # results kept resident in bf16 scratch across all q-tiles of this head.
        @pl.when(qi == 0)
        def _():
            qkv = jnp.dot(x_ref[0], wqkv_ref[0],
                          preferred_element_type=jnp.float32)        # (N, 3Dh) f32
            # For Dh not a multiple of 128 (real DinoV2 Dh=64) the lane slices
            # below cost a one-time relayout per (b, h), amortized over q-tiles.
            q_s[...] = qkv[:, 0:dh].astype(jnp.bfloat16)              # scale pre-folded
            k_s[...] = qkv[:, dh:2 * dh].astype(jnp.bfloat16)
            v_s[...] = qkv[:, 2 * dh:3 * dh].astype(jnp.bfloat16)

        row0 = pl.multiple_of(qi * q_tile, q_tile)
        rows = pl.ds(row0, q_tile)
        q_t = q_s[rows, :]                                            # (Tq, Dh) bf16

        # logits = q_tile @ k^T (contract on Dh), f32 accumulation on the MXU.
        logits = jax.lax.dot_general(
            q_t, k_s[...], (((1,), (1,)), ((), ())),
            preferred_element_type=jnp.float32)                       # (Tq, N)

        # Softmax: max/sum in f32; exp in bf16 where the EUP supports it.
        m = jnp.max(logits, axis=-1, keepdims=True)
        shifted = logits - m
        if use_bf16_exp:
            p = jnp.exp(shifted.astype(jnp.bfloat16))                 # (Tq, N) bf16
            denom = jnp.sum(p.astype(jnp.float32), axis=-1, keepdims=True)
        else:
            p_f32 = jnp.exp(shifted)                                  # (Tq, N) f32
            denom = jnp.sum(p_f32, axis=-1, keepdims=True)
            p = p_f32.astype(jnp.bfloat16)

        ctx = jnp.dot(p, v_s[...], preferred_element_type=jnp.float32)  # (Tq, Dh)
        ctx = ctx * pl.reciprocal(denom, approx=True)                 # deferred norm (EUP)

        # Per-head slice of the output projection, accumulated straight into
        # the resident (N, C) f32 accumulator (no named (Tq, C) temp).
        acc_ref[rows, :] += jnp.dot(ctx.astype(jnp.bfloat16), wp_ref[0],
                                    preferred_element_type=jnp.float32)

        @pl.when((h == last_h) & (qi == last_q))
        def _():
            o_ref[0] = (acc_ref[...] + bias_ref[...]).astype(o_ref.dtype)

    return kernel


def prepare_attention_params(wqkv, wproj, bproj, num_heads,
                             *, param_dtype=jnp.bfloat16):
    """One-time (init-side) re-layout of the nn.Linear parameters.

    wqkv:  (3C, C)  torch qkv.weight      (qkv_bias=False)
    wproj: (C, C)   torch proj.weight
    bproj: (C,)     torch proj.bias

    Returns:
      w_qkv: (H, C, 3*Dh)  fused per-head [q | k | v] slab (Dh**-0.5 folded into q)
      wp:    (H, Dh, C)    per-head output-projection slab
      b:     (1, C) f32    proj bias
    """
    three_c, C = wqkv.shape
    assert three_c == 3 * C
    H = num_heads
    Dh = C // H
    assert C % H == 0
    scale = Dh ** (-0.5)

    wqkv_t = wqkv.T                                        # (C, 3C)

    def per_head(cols):                                    # (C, C) -> (H, C, Dh)
        return cols.reshape(C, H, Dh).transpose(1, 0, 2)

    wq = per_head(wqkv_t[:, 0:C]) * scale                  # scale folded here
    wk = per_head(wqkv_t[:, C:2 * C])
    wv = per_head(wqkv_t[:, 2 * C:3 * C])
    w_qkv = jnp.concatenate([wq, wk, wv], axis=-1)         # (H, C, 3*Dh)
    wp = wproj.T.reshape(H, Dh, C)                         # (H, Dh, C)

    return (w_qkv.astype(param_dtype), wp.astype(param_dtype),
            bproj.reshape(1, C).astype(jnp.float32))


def attention_pallas(x, params, g_info, *, num_heads, q_tile=256,
                     out_dtype=None, use_bf16_exp=None):
    """x: (B, N, C); params from prepare_attention_params.
    Returns (out, g_info[1:]) like the PyTorch module."""
    w_qkv, wp, bias = params
    B, N, C = x.shape
    H = num_heads
    Dh = C // H
    assert C % H == 0

    if N % q_tile != 0:       # fall back to a single query tile
        q_tile = N
    n_qt = N // q_tile
    if out_dtype is None:     # pass jnp.bfloat16 to halve out DMA if downstream allows
        out_dtype = x.dtype
    if use_bf16_exp is None:
        use_bf16_exp = _eup_has_bf16()

    # Cast once in the wrapper: halves x's DMA bytes + VMEM footprint, and the
    # kernel never re-casts the (N, C) block per head.
    x_bf16 = x.astype(jnp.bfloat16)

    kernel = _make_attention_kernel(q_tile, use_bf16_exp)

    out = pl.pallas_call(
        kernel,
        out_shape=jax.ShapeDtypeStruct((B, N, C), out_dtype),
        grid_spec=pltpu.PrefetchScalarGridSpec(
            num_scalar_prefetch=0,
            grid=(B, H, n_qt),                               # h = reduction, q-tile innermost
            in_specs=[
                pl.BlockSpec((1, N, C), lambda b, h, q: (b, 0, 0)),        # x (bf16, resident over h/q)
                pl.BlockSpec((1, C, 3 * Dh), lambda b, h, q: (h, 0, 0)),   # fused qkv weights
                pl.BlockSpec((1, Dh, C), lambda b, h, q: (h, 0, 0)),       # proj slab (per head)
                pl.BlockSpec((1, C), lambda b, h, q: (0, 0)),              # proj bias
            ],
            out_specs=pl.BlockSpec((1, N, C), lambda b, h, q: (b, 0, 0)),
            scratch_shapes=[
                pltpu.VMEM((N, Dh), jnp.bfloat16),           # q (pre-scaled)
                pltpu.VMEM((N, Dh), jnp.bfloat16),           # k
                pltpu.VMEM((N, Dh), jnp.bfloat16),           # v
                pltpu.VMEM((N, C), jnp.float32),             # proj accumulator
            ],
        ),
        compiler_params=pltpu.CompilerParams(
            dimension_semantics=("parallel", "arbitrary", "arbitrary"),
            vmem_limit_bytes=_vmem_limit_bytes(),
        ),
    )(x_bf16, w_qkv, wp, bias)

    _ = g_info[0]           # consumed but unused, matching the module
    return out, g_info[1:]


def attention_reference(x, wqkv, wproj, bproj, num_heads):
    """Pure-JAX f32 reference mirroring the PyTorch module."""
    B, N, C = x.shape
    H = num_heads
    Dh = C // H
    scale = Dh ** (-0.5)
    qkv = x @ wqkv.T                                          # (B, N, 3C)
    qkv = qkv.reshape(B, N, 3, H, Dh).transpose(2, 0, 3, 1, 4)
    q, k, v = qkv[0] * scale, qkv[1], qkv[2]                  # (B, H, N, Dh)
    attn = jnp.einsum('bhnd,bhmd->bhnm', q, k)
    attn = jax.nn.softmax(attn, axis=-1)
    ctx = jnp.einsum('bhnm,bhmd->bhnd', attn, v)
    ctx = ctx.transpose(0, 2, 1, 3).reshape(B, N, C)
    return ctx @ wproj.T + bproj


if __name__ == "__main__":
    # Small lane/sublane-aligned shapes: Dh = C/H = 128 (lane-dense per-head
    # tiles), N = 256 with q_tile = 128 so the query-tile grid axis (Nq = 2)
    # is actually exercised; C = 256 lane-dense output.
    B, N, C, H = 2, 256, 256, 2

    key = jax.random.PRNGKey(0)
    kx, kqkv, kproj, kb, kg = jax.random.split(key, 5)

    x = jax.random.normal(kx, (B, N, C), dtype=jnp.float32)

    # nn.Linear-shaped parameters:
    #   qkv.weight: (3C, C), qkv_bias=False; proj.weight: (C, C); proj.bias: (C,)
    wqkv = jax.random.normal(kqkv, (3 * C, C), dtype=jnp.float32) * 0.02
    wproj = jax.random.normal(kproj, (C, C), dtype=jnp.float32) * 0.02
    bproj = jax.random.normal(kb, (C,), dtype=jnp.float32) * 0.02

    # g_info: list of auxiliary tensors (first entry unused, rest passed through)
    g_info = [jax.random.normal(kg, (4,), dtype=jnp.float32),
              jnp.arange(3, dtype=jnp.float32)]

    params = prepare_attention_params(wqkv, wproj, bproj, H)   # one-time prep

    out, g_rest = attention_pallas(x, params, g_info, num_heads=H, q_tile=128)
    out = jax.block_until_ready(out)

    ref = attention_reference(x, wqkv, wproj, bproj, H)
    assert out.shape == (B, N, C)
    max_err = float(jnp.max(jnp.abs(out - ref)))
    # bf16 MXU inputs / bf16 weights (and possibly bf16 exp) -> relaxed tolerance.
    assert jnp.allclose(out, ref, atol=2e-2, rtol=2e-2), \
        f"mismatch vs reference (max |err| = {max_err})"
    assert len(g_rest) == len(g_info) - 1

    print("KERNEL_OK")
</pallas_src>

<mosaic_0001>
module attributes {stable_mosaic.version = 11 : i64} {
  func.func @kernel(%arg0: i32, %arg1: i32, %arg2: i32, %arg3: memref<1x256x256xbf16, #tpu.memory_space<vmem>>, %arg4: memref<1x256x384xbf16, #tpu.memory_space<vmem>>, %arg5: memref<1x128x256xbf16, #tpu.memory_space<vmem>>, %arg6: memref<1x256xf32, #tpu.memory_space<vmem>>, %arg7: memref<1x256x256xf32, #tpu.memory_space<vmem>>, %arg8: memref<256x128xbf16, #tpu.memory_space<vmem>>, %arg9: memref<256x128xbf16, #tpu.memory_space<vmem>>, %arg10: memref<256x128xbf16, #tpu.memory_space<vmem>>, %arg11: memref<256x256xf32, #tpu.memory_space<vmem>>) attributes {dimension_semantics = [#tpu.dimension_semantics<parallel>, #tpu.dimension_semantics<arbitrary>, #tpu.dimension_semantics<arbitrary>], iteration_bounds = array<i64: 2, 2, 2>, scalar_prefetch = 0 : i64, scratch_operands = 4 : i64, tpu.core_type = #tpu.core_type<tc>, window_params = [{transform_indices = @transform_0, window_bounds = array<i64: 1, 256, 256>}, {transform_indices = @transform_1, window_bounds = array<i64: 1, 256, 384>}, {transform_indices = @transform_2, window_bounds = array<i64: 1, 128, 256>}, {pipeline_mode = #tpu.pipeline_mode<synchronous>, transform_indices = @transform_3, window_bounds = array<i64: 1, 256>}, {transform_indices = @transform_4, window_bounds = array<i64: 1, 256, 256>}]} {
    %c0_i32 = arith.constant 0 : i32
    %0 = arith.cmpi eq, %arg1, %c0_i32 : i32
    %c0_i32_0 = arith.constant 0 : i32
    %1 = arith.cmpi eq, %arg2, %c0_i32_0 : i32
    %2 = arith.andi %0, %1 : i1
    %3 = arith.extui %2 : i1 to i32
    %c0_i32_1 = arith.constant 0 : i32
    %4 = arith.cmpi ne, %3, %c0_i32_1 : i32
    scf.if %4 {
      %cst_19 = arith.constant 0.000000e+00 : f32
      %42 = vector.broadcast %cst_19 : f32 to vector<256x256xf32>
      %c0_20 = arith.constant 0 : index
      %c0_21 = arith.constant 0 : index
      %43 = vector.load %arg11[%c0_20, %c0_21] : memref<256x256xf32, #tpu.memory_space<vmem>>, vector<256x256xf32>
      tpu.vector_store %arg11[%c0_20, %c0_21], %42 {strides = array<i32>} : memref<256x256xf32, #tpu.memory_space<vmem>>, vector<256x256xf32>,
    } else {
    }
    %c0_i32_2 = arith.constant 0 : i32
    %5 = arith.cmpi eq, %arg2, %c0_i32_2 : i32
    %6 = arith.extui %5 : i1 to i32
    %c0_i32_3 = arith.constant 0 : i32
    %7 = arith.cmpi ne, %6, %c0_i32_3 : i32
    scf.if %7 {
      %c0_19 = arith.constant 0 : index
      %c0_20 = arith.constant 0 : index
      %c0_21 = arith.constant 0 : index
      %42 = vector.load %arg3[%c0_19, %c0_20, %c0_21] : memref<1x256x256xbf16, #tpu.memory_space<vmem>>, vector<1x256x256xbf16>
      %43 = vector.shape_cast %42 : vector<1x256x256xbf16> to vector<256x256xbf16>
      %c0_22 = arith.constant 0 : index
      %c0_23 = arith.constant 0 : index
      %c0_24 = arith.constant 0 : index
      %44 = vector.load %arg4[%c0_22, %c0_23, %c0_24] : memref<1x256x384xbf16, #tpu.memory_space<vmem>>, vector<1x256x384xbf16>
      %45 = vector.shape_cast %44 : vector<1x256x384xbf16> to vector<256x384xbf16>
      %cst_25 = arith.constant dense<0.000000e+00> : vector<256x384xf32>
      %46 = tpu.matmul %43, %45, %cst_25 {dimension_numbers = #tpu.dot_dimension_numbers<[1], [0], [0], [1], [0, 0, 1, 1], [], []>} : vector<256x256xbf16>, vector<256x384xbf16>, vector<256x384xf32> -> vector<256x384xf32>
      %47 = vector.extract_strided_slice %46 {offsets = [0, 0], sizes = [256, 128], strides = [1, 1]} : vector<256x384xf32> to vector<256x128xf32>
      %48 = arith.truncf %47 : vector<256x128xf32> to vector<256x128xbf16>
      %c0_26 = arith.constant 0 : index
      %c0_27 = arith.constant 0 : index
      %49 = vector.load %arg8[%c0_26, %c0_27] : memref<256x128xbf16, #tpu.memory_space<vmem>>, vector<256x128xbf16>
      tpu.vector_store %arg8[%c0_26, %c0_27], %48 {strides = array<i32>} : memref<256x128xbf16, #tpu.memory_space<vmem>>, vector<256x128xbf16>,
      %50 = vector.extract_strided_slice %46 {offsets = [0, 128], sizes = [256, 128], strides = [1, 1]} : vector<256x384xf32> to vector<256x128xf32>
      %51 = arith.truncf %50 : vector<256x128xf32> to vector<256x128xbf16>
      %c0_28 = arith.constant 0 : index
      %c0_29 = arith.constant 0 : index
      %52 = vector.load %arg9[%c0_28, %c0_29] : memref<256x128xbf16, #tpu.memory_space<vmem>>, vector<256x128xbf16>
      tpu.vector_store %arg9[%c0_28, %c0_29], %51 {strides = array<i32>} : memref<256x128xbf16, #tpu.memory_space<vmem>>, vector<256x128xbf16>,
      %53 = vector.extract_strided_slice %46 {offsets = [0, 256], sizes = [256, 128], strides = [1, 1]} : vector<256x384xf32> to vector<256x128xf32>
      %54 = arith.truncf %53 : vector<256x128xf32> to vector<256x128xbf16>
      %c0_30 = arith.constant 0 : index
      %c0_31 = arith.constant 0 : index
      %55 = vector.load %arg10[%c0_30, %c0_31] : memref<256x128xbf16, #tpu.memory_space<vmem>>, vector<256x128xbf16>
      tpu.vector_store %arg10[%c0_30, %c0_31], %54 {strides = array<i32>} : memref<256x128xbf16, #tpu.memory_space<vmem>>, vector<256x128xbf16>,
    } else {
    }
    %c128_i32 = arith.constant 128 : i32
    %8 = arith.muli %arg2, %c128_i32 : i32
    %9 = tpu.assume_multiple %8, 128 : i32
    %10 = arith.index_cast %9 : i32 to index
    %c0 = arith.constant 0 : index
    %11 = vector.load %arg8[%10, %c0] : memref<256x128xbf16, #tpu.memory_space<vmem>>, vector<128x128xbf16>
    %c0_4 = arith.constant 0 : index
    %c0_5 = arith.constant 0 : index
    %12 = vector.load %arg9[%c0_4, %c0_5] : memref<256x128xbf16, #tpu.memory_space<vmem>>, vector<256x128xbf16>
    %cst = arith.constant dense<0.000000e+00> : vector<128x256xf32>
    %13 = tpu.matmul %11, %12, %cst {dimension_numbers = #tpu.dot_dimension_numbers<[1], [1], [0], [0], [0, 0, 1, 0], [], []>} : vector<128x128xbf16>, vector<256x128xbf16>, vector<128x256xf32> -> vector<128x256xf32>
    %cst_6 = arith.constant dense<0xFF800000> : vector<128xf32>
    %14 = vector.multi_reduction <maximumf>, %13, %cst_6 [1] : vector<128x256xf32> to vector<128xf32>
    %15 = vector.shape_cast %14 : vector<128xf32> to vector<128x1xf32>
    %16 = vector.broadcast %15 : vector<128x1xf32> to vector<128x256xf32>
    %17 = arith.subf %13, %16 : vector<128x256xf32>
    %18 = arith.truncf %17 : vector<128x256xf32> to vector<128x256xbf16>
    %19 = math.exp %18 : vector<128x256xbf16>
    %20 = arith.extf %19 : vector<128x256xbf16> to vector<128x256xf32>
    %cst_7 = arith.constant dense<0.000000e+00> : vector<128xf32>
    %21 = vector.multi_reduction <add>, %20, %cst_7 [1] : vector<128x256xf32> to vector<128xf32>
    %22 = vector.shape_cast %21 : vector<128xf32> to vector<128x1xf32>
    %c0_8 = arith.constant 0 : index
    %c0_9 = arith.constant 0 : index
    %23 = vector.load %arg10[%c0_8, %c0_9] : memref<256x128xbf16, #tpu.memory_space<vmem>>, vector<256x128xbf16>
    %cst_10 = arith.constant dense<0.000000e+00> : vector<128x128xf32>
    %24 = tpu.matmul %19, %23, %cst_10 {dimension_numbers = #tpu.dot_dimension_numbers<[1], [0], [0], [1], [0, 0, 1, 1], [], []>} : vector<128x256xbf16>, vector<256x128xbf16>, vector<128x128xf32> -> vector<128x128xf32>
    %25 = tpu.reciprocal %22 {approx = true} : vector<128x1xf32> -> vector<128x1xf32>
    %26 = vector.broadcast %25 : vector<128x1xf32> to vector<128x128xf32>
    %27 = arith.mulf %24, %26 : vector<128x128xf32>
    %28 = arith.index_cast %9 : i32 to index
    %c0_11 = arith.constant 0 : index
    %29 = vector.load %arg11[%28, %c0_11] : memref<256x256xf32, #tpu.memory_space<vmem>>, vector<128x256xf32>
    %30 = arith.truncf %27 : vector<128x128xf32> to vector<128x128xbf16>
    %c0_12 = arith.constant 0 : index
    %c0_13 = arith.constant 0 : index
    %c0_14 = arith.constant 0 : index
    %31 = vector.load %arg5[%c0_12, %c0_13, %c0_14] : memref<1x128x256xbf16, #tpu.memory_space<vmem>>, vector<1x128x256xbf16>
    %32 = vector.shape_cast %31 : vector<1x128x256xbf16> to vector<128x256xbf16>
    %cst_15 = arith.constant dense<0.000000e+00> : vector<128x256xf32>
    %33 = tpu.matmul %30, %32, %cst_15 {dimension_numbers = #tpu.dot_dimension_numbers<[1], [0], [0], [1], [0, 0, 1, 1], [], []>} : vector<128x128xbf16>, vector<128x256xbf16>, vector<128x256xf32> -> vector<128x256xf32>
    %34 = arith.addf %29, %33 : vector<128x256xf32>
    %35 = arith.index_cast %9 : i32 to index
    %c0_16 = arith.constant 0 : index
    %36 = vector.load %arg11[%35, %c0_16] : memref<256x256xf32, #tpu.memory_space<vmem>>, vector<128x256xf32>
    tpu.vector_store %arg11[%35, %c0_16], %34 {strides = array<i32>} : memref<256x256xf32, #tpu.memory_space<vmem>>, vector<128x256xf32>,
    %c1_i32 = arith.constant 1 : i32
    %37 = arith.cmpi eq, %arg1, %c1_i32 : i32
    %c1_i32_17 = arith.constant 1 : i32
    %38 = arith.cmpi eq, %arg2, %c1_i32_17 : i32
    %39 = arith.andi %37, %38 : i1
    %40 = arith.extui %39 : i1 to i32
    %c0_i32_18 = arith.constant 0 : i32
    %41 = arith.cmpi ne, %40, %c0_i32_18 : i32
    scf.if %41 {
      %c0_19 = arith.constant 0 : index
      %c0_20 = arith.constant 0 : index
      %42 = vector.load %arg11[%c0_19, %c0_20] : memref<256x256xf32, #tpu.memory_space<vmem>>, vector<256x256xf32>
      %c0_21 = arith.constant 0 : index
      %c0_22 = arith.constant 0 : index
      %43 = vector.load %arg6[%c0_21, %c0_22] : memref<1x256xf32, #tpu.memory_space<vmem>>, vector<1x256xf32>
      %44 = vector.broadcast %43 : vector<1x256xf32> to vector<256x256xf32>
      %45 = arith.addf %42, %44 : vector<256x256xf32>
      %c0_23 = arith.constant 0 : index
      %c0_24 = arith.constant 0 : index
      %c0_25 = arith.constant 0 : index
      %46 = vector.load %arg7[%c0_23, %c0_24, %c0_25] : memref<1x256x256xf32, #tpu.memory_space<vmem>>, vector<1x256x256xf32>
      %47 = vector.shape_cast %46 : vector<1x256x256xf32> to vector<256x256xf32>
      %48 = vector.shape_cast %45 : vector<256x256xf32> to vector<1x256x256xf32>
      tpu.vector_store %arg7[%c0_23, %c0_24, %c0_25], %48 {strides = array<i32>} : memref<1x256x256xf32, #tpu.memory_space<vmem>>, vector<1x256x256xf32>,
    } else {
    }
    return
  }
  func.func @transform_0(%arg0: i32, %arg1: i32, %arg2: i32) -> (i32, i32, i32) {
    %c0_i32 = arith.constant 0 : i32
    %c0_i32_0 = arith.constant 0 : i32
    %c0_i32_1 = arith.constant 0 : i32
    return %arg0, %c0_i32, %c0_i32_0 : i32, i32, i32
  }
  func.func @transform_1(%arg0: i32, %arg1: i32, %arg2: i32) -> (i32, i32, i32) {
    %c0_i32 = arith.constant 0 : i32
    %c0_i32_0 = arith.constant 0 : i32
    %c0_i32_1 = arith.constant 0 : i32
    return %arg1, %c0_i32, %c0_i32_0 : i32, i32, i32
  }
  func.func @transform_2(%arg0: i32, %arg1: i32, %arg2: i32) -> (i32, i32, i32) {
    %c0_i32 = arith.constant 0 : i32
    %c0_i32_0 = arith.constant 0 : i32
    %c0_i32_1 = arith.constant 0 : i32
    return %arg1, %c0_i32, %c0_i32_0 : i32, i32, i32
  }
  func.func @transform_3(%arg0: i32, %arg1: i32, %arg2: i32) -> (i32, i32) {
    %c0_i32 = arith.constant 0 : i32
    %c0_i32_0 = arith.constant 0 : i32
    %c0_i32_1 = arith.constant 0 : i32
    return %c0_i32, %c0_i32_0 : i32, i32
  }
  func.func @transform_4(%arg0: i32, %arg1: i32, %arg2: i32) -> (i32, i32, i32) {
    %c0_i32 = arith.constant 0 : i32
    %c0_i32_0 = arith.constant 0 : i32
    %c0_i32_1 = arith.constant 0 : i32
    return %arg0, %c0_i32, %c0_i32_0 : i32, i32, i32
  }
}

</mosaic_0001>

<llo_original>
// kernel: tpu_custom_call.1
$region0: #{tpu_custom_call.1}
  #allocation0 [shape = 'u32[]', space=smem, size = 0x4, offset = 0x4, fixed_abs, tag = 'smem constant byte address 0x4 - core index']
  #allocation1 [shape = 'u32[144,128]{1,0:T(1,128)}', space=vmem, size = 0x12000, scoped, tag = 'internal scratch']
  #allocation2 [shape = 'bf16[256,128]{1,0:T(16,128)(2,1)}', space=vmem, size = 0x10000, scoped, tag = 'scratch operand']
  #allocation3 [shape = 'bf16[256,128]{1,0:T(16,128)(2,1)}', space=vmem, size = 0x10000, scoped, tag = 'scratch operand']
  #allocation4 [shape = 'bf16[256,128]{1,0:T(16,128)(2,1)}', space=vmem, size = 0x10000, scoped, tag = 'scratch operand']
  #allocation5 [shape = 'f32[256,256]{1,0:T(8,128)}', space=vmem, size = 0x40000, scoped, tag = 'scratch operand']
  %s0 = inlined_call_operand.hbm [shape: bf16[2,256,256], index: 0, kind: input, shape index: {}]
  %s1 = inlined_call_operand.hbm [shape: bf16[2,256,384], index: 1, kind: input, shape index: {}]
  %s2 = inlined_call_operand.hbm [shape: bf16[2,128,256], index: 2, kind: input, shape index: {}]
  %s3 = inlined_call_operand.vmem [shape: f32[1,256], index: 3, kind: input, shape index: {}]
  %s4 = inlined_call_operand.hbm [shape: f32[2,256,256], index: 4, kind: output, shape index: {}]
  %s5 = sld [smem:[#allocation0]]
  $region73: #{tpu_custom_call.1} parent=0
    _
  %s7 = ssub.s32 1, %s5
  %s8 = scalar_select 0, %s7, %s5
  $region1: #{tpu_custom_call.1} parent=0
    #allocation6 [shape = 'u8[262144]{0}', space=vmem, size = 0x40000, scoped, tag = 'input window, operand 0']
    #allocation7 [shape = 's32[2]{0}', space=sflag, size = 0x8, scoped, tag = 'scoped memory for tpu_custom_call.1']
    #allocation8 [shape = 's32[2]{0}', space=sflag, size = 0x8, scoped, tag = 'scoped memory for tpu_custom_call.1']
    #allocation9 [shape = 'u8[393216]{0}', space=vmem, size = 0x60000, scoped, tag = 'input window, operand 1']
    #allocation10 [shape = 's32[2]{0}', space=sflag, size = 0x8, scoped, tag = 'scoped memory for tpu_custom_call.1']
    #allocation11 [shape = 'u8[131072]{0}', space=vmem, size = 0x20000, scoped, tag = 'input window, operand 2']
    #allocation12 [shape = 'u8[524288]{0}', space=vmem, size = 0x80000, scoped, tag = 'output window, operand 0']
    %9 = vsyncpa [#allocation7], 0
    %s10 = scalar_lea.sflag [#allocation7], 1
    %11 = vsyncpa %s10, 0
    %12 = vsyncpa [#allocation10], 0
    %s13 = scalar_lea.sflag [#allocation10], 1
    %14 = vsyncpa %s13, 0
    %15 = vsyncpa [#allocation8], 0
    %s16 = scalar_lea.sflag [#allocation8], 1
    %17 = vsyncpa %s16, 0
    loop: start=0, step=1, limit=10
    $region2: #{tpu_custom_call.1} parent=1 // loop_pre_header
      _
    $region3: #{tpu_custom_call.1} parent=1 // loop_header
      %s19 = sphi 0, %s23
      %p20 = scmp.ge.s32.totalorder %s19, 10
      %s26 = sphi 0, %s45
      %s27 = sphi 0, %s41
      %s28 = sphi 0, %s37
      %s29 = sphi 0, %s26
      %s30 = sphi 0, %s27
      %s31 = sphi 0, %s28
      %s32 = sphi 0, %s29
      %s33 = sphi 0, %s30
      %s34 = sphi 0, %s31
      %s48 = sphi 0, %s50
      %s51 = sphi 0, %s48
      %s52 = sphi 0, %s51
      %s68 = sphi 0, %s52
      %s74 = sphi 0, %s76
      %s77 = sphi 0, %s74
      %s78 = sphi 0, %s77
      %s94 = sphi 0, %s78
      %s100 = sphi 0, %s102
      %s103 = sphi 0, %s100
      %s104 = sphi 0, %s103
      %s120 = sphi 0, %s104
      %s124 = sphi 0, %s124
      %s126 = sphi 0, %s124
      %s127 = sphi 0, %s126
      %s141 = sphi 0, %s127
      %s147 = sphi 0, %s149
      %s150 = sphi 0, %s147
      %s151 = sphi 0, %s150
      %s167 = sphi 0, %s151
    $region4: #{tpu_custom_call.1} parent=1 // loop_header_branch
      %22 = sbr.rel (%p20) target = $region8
    $region5: #{tpu_custom_call.1} parent=1 // loop_body
      %s24 = ssub.s32 %s19, 1
      %s25 = ssub.s32 %s19, 2
      %s35 = sadd.s32 1, %s28
      %p36 = scmp.ge.s32.totalorder %s35, 2
      %s37 = scalar_select %p36, 0, %s35
      %s38 = sadd.s32 1, %s27
      %s39 = scalar_select %p36, %s38, %s27
      %p40 = scmp.ge.s32.totalorder %s39, 2
      %s41 = scalar_select %p40, 0, %s39
      %s42 = sadd.s32 1, %s26
      %s43 = scalar_select %p40, %s42, %s26
      %p44 = scmp.ge.s32.totalorder %s43, 2
      %s45 = scalar_select %p44, 0, %s43
      %s46 = ssub.s32 %s26, %s45
      %p47 = scmp.eq.s32.totalorder %s46, 0
      %s49 = sadd.s32 %s48, 1
      %s50 = scalar_select %p47, %s48, %s49
      %p53 = pneg %p47
      %p54 = scmp.eq.s32.totalorder %s19, 7
      %p55 = por %p53, %p54
      %p56 = scmp.ne.s32.totalorder %s48, %s51
      %p57 = scmp.eq.s32.totalorder %s19, 0
      %p58 = por %p56, %p57
      %p59 = scmp.ne.s32.totalorder %s48, %s51
      %p60 = scmp.eq.s32.totalorder %s24, 7
      %p61 = por %p59, %p60
      %p62 = scmp.ne.s32.totalorder %s51, %s52
      %p63 = scmp.eq.s32.totalorder %s24, 0
      %p64 = por %p62, %p63
      %p65 = scmp.ne.s32.totalorder %s51, %s52
      %p66 = scmp.eq.s32.totalorder %s25, 7
      %p67 = por %p65, %p66
      %p69 = scmp.ne.s32.totalorder %s52, %s68
      %p70 = scmp.eq.s32.totalorder %s25, 0
      %p71 = por %p69, %p70
      %s72 = ssub.s32 %s27, %s41
      %p73 = scmp.eq.s32.totalorder %s72, 0
      %s75 = sadd.s32 %s74, 1
      %s76 = scalar_select %p73, %s74, %s75
      %p79 = pneg %p73
      %p80 = scmp.eq.s32.totalorder %s19, 7
      %p81 = por %p79, %p80
      %p82 = scmp.ne.s32.totalorder %s74, %s77
      %p83 = scmp.eq.s32.totalorder %s19, 0
      %p84 = por %p82, %p83
      %p85 = scmp.ne.s32.totalorder %s74, %s77
      %p86 = scmp.eq.s32.totalorder %s24, 7
      %p87 = por %p85, %p86
      %p88 = scmp.ne.s32.totalorder %s77, %s78
      %p89 = scmp.eq.s32.totalorder %s24, 0
      %p90 = por %p88, %p89
      %p91 = scmp.ne.s32.totalorder %s77, %s78
      %p92 = scmp.eq.s32.totalorder %s25, 7
      %p93 = por %p91, %p92
      %p95 = scmp.ne.s32.totalorder %s78, %s94
      %p96 = scmp.eq.s32.totalorder %s25, 0
      %p97 = por %p95, %p96
      %s98 = ssub.s32 %s27, %s41
      %p99 = scmp.eq.s32.totalorder %s98, 0
      %s101 = sadd.s32 %s100, 1
      %s102 = scalar_select %p99, %s100, %s101
      %p105 = pneg %p99
      %p106 = scmp.eq.s32.totalorder %s19, 7
      %p107 = por %p105, %p106
      %p108 = scmp.ne.s32.totalorder %s100, %s103
      %p109 = scmp.eq.s32.totalorder %s19, 0
      %p110 = por %p108, %p109
      %p111 = scmp.ne.s32.totalorder %s100, %s103
      %p112 = scmp.eq.s32.totalorder %s24, 7
      %p113 = por %p111, %p112
      %p114 = scmp.ne.s32.totalorder %s103, %s104
      %p115 = scmp.eq.s32.totalorder %s24, 0
      %p116 = por %p114, %p115
      %p117 = scmp.ne.s32.totalorder %s103, %s104
      %p118 = scmp.eq.s32.totalorder %s25, 7
      %p119 = por %p117, %p118
      %p121 = scmp.ne.s32.totalorder %s104, %s120
      %p122 = scmp.eq.s32.totalorder %s25, 0
      %p123 = por %p121, %p122
      %s125 = sadd.s32 %s124, 1
      %p128 = scmp.eq.s32.totalorder %s19, 7
      %p129 = scmp.ne.s32.totalorder %s124, %s126
      %p130 = scmp.eq.s32.totalorder %s19, 0
      %p131 = por %p129, %p130
      %p132 = scmp.ne.s32.totalorder %s124, %s126
      %p133 = scmp.eq.s32.totalorder %s24, 7
      %p134 = por %p132, %p133
      %p135 = scmp.ne.s32.totalorder %s126, %s127
      %p136 = scmp.eq.s32.totalorder %s24, 0
      %p137 = por %p135, %p136
      %p138 = scmp.ne.s32.totalorder %s126, %s127
      %p139 = scmp.eq.s32.totalorder %s25, 7
      %p140 = por %p138, %p139
      %p142 = scmp.ne.s32.totalorder %s127, %s141
      %p143 = scmp.eq.s32.totalorder %s25, 0
      %p144 = por %p142, %p143
      %s145 = ssub.s32 %s26, %s45
      %p146 = scmp.eq.s32.totalorder %s145, 0
      %s148 = sadd.s32 %s147, 1
      %s149 = scalar_select %p146, %s147, %s148
      %p152 = pneg %p146
      %p153 = scmp.eq.s32.totalorder %s19, 7
      %p154 = por %p152, %p153
      %p155 = scmp.ne.s32.totalorder %s147, %s150
      %p156 = scmp.eq.s32.totalorder %s19, 0
      %p157 = por %p155, %p156
      %p158 = scmp.ne.s32.totalorder %s147, %s150
      %p159 = scmp.eq.s32.totalorder %s24, 7
      %p160 = por %p158, %p159
      %p161 = scmp.ne.s32.totalorder %s150, %s151
      %p162 = scmp.eq.s32.totalorder %s24, 0
      %p163 = por %p161, %p162
      %p164 = scmp.ne.s32.totalorder %s150, %s151
      %p165 = scmp.eq.s32.totalorder %s25, 7
      %p166 = por %p164, %p165
      %p168 = scmp.ne.s32.totalorder %s151, %s167
      %p169 = scmp.eq.s32.totalorder %s25, 0
      %p170 = por %p168, %p169
      %p171 = scmp.le.s32.totalorder 1, %s19
      %p172 = scmp.lt.s32.totalorder %s19, 9
      %p173 = pnand %p171, %p172
      %p174 = pneg %p173
      // Predicated region
      $region9: #{tpu_custom_call.1} parent=5 // pred_check
        _
      $region10: #{tpu_custom_call.1} parent=5 // pred_check_branch
        %176 = sbr.rel (%p173) target = $region12
      $region11: #{tpu_custom_call.1} parent=5 // pred_region
        %s177 = ssub.s32 %s19, 1
        // Predicated region
        $region13: #{tpu_custom_call.1} parent=11 // pred_check
          %p178 = pneg %p137
        $region14: #{tpu_custom_call.1} parent=11 // pred_check_branch
          %180 = sbr.rel (%p178) target = $region16
        $region15: #{tpu_custom_call.1} parent=11 // pred_region
          _
        $region16: #{tpu_custom_call.1} parent=11 // pred_fallthru
          _
      $region12: #{tpu_custom_call.1} parent=5 // pred_fallthru
        _
      %p181 = scmp.lt.s32.totalorder %s19, 8
      // Predicated region
      $region17: #{tpu_custom_call.1} parent=5 // pred_check
        %p182 = pneg %p181
      $region18: #{tpu_custom_call.1} parent=5 // pred_check_branch
        %184 = sbr.rel (%p182) target = $region20
      $region19: #{tpu_custom_call.1} parent=5 // pred_region
        // Predicated region
        $region21: #{tpu_custom_call.1} parent=19 // pred_check
          %p185 = pneg %p58
        $region22: #{tpu_custom_call.1} parent=19 // pred_check_branch
          %187 = sbr.rel (%p185) target = $region24
        $region23: #{tpu_custom_call.1} parent=19 // pred_region
          %s188 = sand.u32 %s48, 1
          %s189 = scalar_lea.sflag [#allocation7], %s188
          %s190 = sand.u32 %s48, 1
          %s191 = smul.addr %s190, 256
          %s192 = scalar_lea.vmem [#allocation6], %s191
          %s194 = ssub.s32 4096, 4096
          %195 = vsyncadd %s189, %s194
          %s196 = smul.addr %s26, 64
          %s197 = smul.addr %s196, 64
          %s198 = scalar_lea.hbm %s0, %s197
          %s199 = sshll.u32 %s192, 4
          %s200 = int_to_ptr.vmem [resolvable:$true] %s199
          %205 = dma.hbm_to_vmem [thread:$0]  %s198, 4096, %s200, %s189, 128, 128, 8
        $region24: #{tpu_custom_call.1} parent=19 // pred_fallthru
          _
        // Predicated region
        $region25: #{tpu_custom_call.1} parent=19 // pred_check
          %p206 = pneg %p84
        $region26: #{tpu_custom_call.1} parent=19 // pred_check_branch
          %208 = sbr.rel (%p206) target = $region28
        $region27: #{tpu_custom_call.1} parent=19 // pred_region
          %s209 = sand.u32 %s19, 1
          %s210 = scalar_lea.sflag [#allocation10], %s209
          %s211 = sand.u32 %s74, 1
          %s212 = smul.addr %s211, 384
          %s213 = scalar_lea.vmem [#allocation9], %s212
          %s215 = ssub.s32 6144, 6144
          %216 = vsyncadd %s210, %s215
          %s217 = smul.addr %s27, 96
          %s218 = smul.addr %s217, 64
          %s219 = scalar_lea.hbm %s1, %s218
          %s220 = sshll.u32 %s213, 4
          %s221 = int_to_ptr.vmem [resolvable:$true] %s220
          %226 = dma.hbm_to_vmem [thread:$0]  %s219, 6144, %s221, %s210, 192, 192, 12
        $region28: #{tpu_custom_call.1} parent=19 // pred_fallthru
          _
        // Predicated region
        $region29: #{tpu_custom_call.1} parent=19 // pred_check
          %p227 = pneg %p110
        $region30: #{tpu_custom_call.1} parent=19 // pred_check_branch
          %229 = sbr.rel (%p227) target = $region32
        $region31: #{tpu_custom_call.1} parent=19 // pred_region
          %s230 = sand.u32 %s19, 1
          %s231 = scalar_lea.sflag [#allocation10], %s230
          %s232 = sand.u32 %s100, 1
          %s233 = smul.addr %s232, 128
          %s234 = scalar_lea.vmem [#allocation11], %s233
          %s236 = ssub.s32 2048, 2048
          %237 = vsyncadd %s231, %s236
          %s238 = smul.addr %s27, 32
          %s239 = smul.addr %s238, 64
          %s240 = scalar_lea.hbm %s2, %s239
          %s241 = sshll.u32 %s234, 4
          %s242 = int_to_ptr.vmem [resolvable:$true] %s241
          %247 = dma.hbm_to_vmem [thread:$0]  %s240, 2048, %s242, %s231, 128, 128, 8
        $region32: #{tpu_custom_call.1} parent=19 // pred_fallthru
          _
      $region20: #{tpu_custom_call.1} parent=5 // pred_fallthru
        _
      %p248 = scmp.le.s32.totalorder 1, %s19
      %p249 = scmp.lt.s32.totalorder %s19, 9
      %p250 = pnand %p248, %p249
      %p251 = pneg %p250
      // Predicated region
      $region33: #{tpu_custom_call.1} parent=5 // pred_check
        _
      $region34: #{tpu_custom_call.1} parent=5 // pred_check_branch
        %253 = sbr.rel (%p250) target = $region36
      $region35: #{tpu_custom_call.1} parent=5 // pred_region
        %s254 = ssub.s32 %s19, 1
        %s255 = sand.u32 %s51, 1
        %s256 = scalar_lea.sflag [#allocation7], %s255
        %s257 = sand.u32 %s51, 1
        %s258 = smul.addr %s257, 256
        %s259 = scalar_lea.vmem [#allocation6], %s258
        // Predicated region
        $region37: #{tpu_custom_call.1} parent=35 // pred_check
          %p260 = pneg %p64
        $region38: #{tpu_custom_call.1} parent=35 // pred_check_branch
          %262 = sbr.rel (%p260) target = $region40
        $region39: #{tpu_custom_call.1} parent=35 // pred_region
          %263 = dma.done %s256, 4096
        $region40: #{tpu_custom_call.1} parent=35 // pred_fallthru
          _
        %s264 = sand.u32 %s24, 1
        %s265 = scalar_lea.sflag [#allocation10], %s264
        %s266 = sand.u32 %s77, 1
        %s267 = smul.addr %s266, 384
        %s268 = scalar_lea.vmem [#allocation9], %s267
        // Predicated region
        $region41: #{tpu_custom_call.1} parent=35 // pred_check
          %p269 = pneg %p90
        $region42: #{tpu_custom_call.1} parent=35 // pred_check_branch
          %271 = sbr.rel (%p269) target = $region44
        $region43: #{tpu_custom_call.1} parent=35 // pred_region
          %272 = dma.done %s265, 6144
        $region44: #{tpu_custom_call.1} parent=35 // pred_fallthru
          _
        %s273 = sand.u32 %s24, 1
        %s274 = scalar_lea.sflag [#allocation10], %s273
        %s275 = sand.u32 %s103, 1
        %s276 = smul.addr %s275, 128
        %s277 = scalar_lea.vmem [#allocation11], %s276
        // Predicated region
        $region45: #{tpu_custom_call.1} parent=35 // pred_check
          %p278 = pneg %p116
        $region46: #{tpu_custom_call.1} parent=35 // pred_check_branch
          %280 = sbr.rel (%p278) target = $region48
        $region47: #{tpu_custom_call.1} parent=35 // pred_region
          %281 = dma.done %s274, 2048
        $region48: #{tpu_custom_call.1} parent=35 // pred_fallthru
          _
        %s282 = sand.u32 %s51, 1
        %s283 = scalar_lea.sflag [#allocation7], %s282
        %s284 = sand.u32 %s51, 1
        %s285 = smul.addr %s284, 256
        %s286 = scalar_lea.vmem [#allocation6], %s285
        %p287 = pneg %p64
        %p288 = pneg %p61
        %s289 = sand.u32 %s24, 1
        %s290 = scalar_lea.sflag [#allocation10], %s289
        %s291 = sand.u32 %s77, 1
        %s292 = smul.addr %s291, 384
        %s293 = scalar_lea.vmem [#allocation9], %s292
        %p294 = pneg %p90
        %p295 = pneg %p87
        %s296 = sand.u32 %s24, 1
        %s297 = scalar_lea.sflag [#allocation10], %s296
        %s298 = sand.u32 %s103, 1
        %s299 = smul.addr %s298, 128
        %s300 = scalar_lea.vmem [#allocation11], %s299
        %p301 = pneg %p116
        %p302 = pneg %p113
        %p303 = pneg %p137
        %p304 = pneg %p134
        %p305 = pneg %p163
        %p306 = pneg %p160
        %s307 = sand.u32 %s150, 1
        %s308 = scalar_lea.sflag [#allocation8], %s307
        %s309 = sand.u32 %s150, 1
        %s310 = smul.addr %s309, 512
        %s311 = scalar_lea.vmem [#allocation12], %s310
        %p313 = scmp.eq.s32.totalorder %s30, 0
        %p314 = scmp.eq.s32.totalorder %s31, 0
        %p315 = pnand %p313, %p314
        %p316 = pneg %p315
        // Predicated region
        $region49: #{tpu_custom_call.1} parent=35 // pred_check
          _
        $region50: #{tpu_custom_call.1} parent=35 // pred_check_branch
          %318 = sbr.rel (%p315) target = $region52
        $region51: #{tpu_custom_call.1} parent=35 // pred_region
          %319 = vst [vmem:[#allocation5] sm:$0xff] 0.0
          %320 = vst [vmem:[#allocation5 + $0x8] sm:$0xff] 0.0
          %321 = vst [vmem:[#allocation5 + $0x10] sm:$0xff] 0.0
          %322 = vst [vmem:[#allocation5 + $0x18] sm:$0xff] 0.0
          %323 = vst [vmem:[#allocation5 + $0x20] sm:$0xff] 0.0
          %324 = vst [vmem:[#allocation5 + $0x28] sm:$0xff] 0.0
          %325 = vst [vmem:[#allocation5 + $0x30] sm:$0xff] 0.0
          %326 = vst [vmem:[#allocation5 + $0x38] sm:$0xff] 0.0
          %327 = vst [vmem:[#allocation5 + $0x40] sm:$0xff] 0.0
          %328 = vst [vmem:[#allocation5 + $0x48] sm:$0xff] 0.0
          %329 = vst [vmem:[#allocation5 + $0x50] sm:$0xff] 0.0
          %330 = vst [vmem:[#allocation5 + $0x58] sm:$0xff] 0.0
          %331 = vst [vmem:[#allocation5 + $0x60] sm:$0xff] 0.0
          %332 = vst [vmem:[#allocation5 + $0x68] sm:$0xff] 0.0
          %333 = vst [vmem:[#allocation5 + $0x70] sm:$0xff] 0.0
          %334 = vst [vmem:[#allocation5 + $0x78] sm:$0xff] 0.0
          %335 = vst [vmem:[#allocation5 + $0x80] sm:$0xff] 0.0
          %336 = vst [vmem:[#allocation5 + $0x88] sm:$0xff] 0.0
          %337 = vst [vmem:[#allocation5 + $0x90] sm:$0xff] 0.0
          %338 = vst [vmem:[#allocation5 + $0x98] sm:$0xff] 0.0
          %339 = vst [vmem:[#allocation5 + $0xa0] sm:$0xff] 0.0
          %340 = vst [vmem:[#allocation5 + $0xa8] sm:$0xff] 0.0
          %341 = vst [vmem:[#allocation5 + $0xb0] sm:$0xff] 0.0
          %342 = vst [vmem:[#allocation5 + $0xb8] sm:$0xff] 0.0
          %343 = vst [vmem:[#allocation5 + $0xc0] sm:$0xff] 0.0
          %344 = vst [vmem:[#allocation5 + $0xc8] sm:$0xff] 0.0
          %345 = vst [vmem:[#allocation5 + $0xd0] sm:$0xff] 0.0
          %346 = vst [vmem:[#allocation5 + $0xd8] sm:$0xff] 0.0
          %347 = vst [vmem:[#allocation5 + $0xe0] sm:$0xff] 0.0
          %348 = vst [vmem:[#allocation5 + $0xe8] sm:$0xff] 0.0
          %349 = vst [vmem:[#allocation5 + $0xf0] sm:$0xff] 0.0
          %350 = vst [vmem:[#allocation5 + $0xf8] sm:$0xff] 0.0
          %351 = vst [vmem:[#allocation5 + $0x100] sm:$0xff] 0.0
          %352 = vst [vmem:[#allocation5 + $0x108] sm:$0xff] 0.0
          %353 = vst [vmem:[#allocation5 + $0x110] sm:$0xff] 0.0
          %354 = vst [vmem:[#allocation5 + $0x118] sm:$0xff] 0.0
          %355 = vst [vmem:[#allocation5 + $0x120] sm:$0xff] 0.0
          %356 = vst [vmem:[#allocation5 + $0x128] sm:$0xff] 0.0
          %357 = vst [vmem:[#allocation5 + $0x130] sm:$0xff] 0.0
          %358 = vst [vmem:[#allocation5 + $0x138] sm:$0xff] 0.0
          %359 = vst [vmem:[#allocation5 + $0x140] sm:$0xff] 0.0
          %360 = vst [vmem:[#allocation5 + $0x148] sm:$0xff] 0.0
          %361 = vst [vmem:[#allocation5 + $0x150] sm:$0xff] 0.0
          %362 = vst [vmem:[#allocation5 + $0x158] sm:$0xff] 0.0
          %363 = vst [vmem:[#allocation5 + $0x160] sm:$0xff] 0.0
          %364 = vst [vmem:[#allocation5 + $0x168] sm:$0xff] 0.0
          %365 = vst [vmem:[#allocation5 + $0x170] sm:$0xff] 0.0
          %366 = vst [vmem:[#allocation5 + $0x178] sm:$0xff] 0.0
          %367 = vst [vmem:[#allocation5 + $0x180] sm:$0xff] 0.0
          %368 = vst [vmem:[#allocation5 + $0x188] sm:$0xff] 0.0
          %369 = vst [vmem:[#allocation5 + $0x190] sm:$0xff] 0.0
          %370 = vst [vmem:[#allocation5 + $0x198] sm:$0xff] 0.0
          %371 = vst [vmem:[#allocation5 + $0x1a0] sm:$0xff] 0.0
          %372 = vst [vmem:[#allocation5 + $0x1a8] sm:$0xff] 0.0
          %373 = vst [vmem:[#allocation5 + $0x1b0] sm:$0xff] 0.0
          %374 = vst [vmem:[#allocation5 + $0x1b8] sm:$0xff] 0.0
          %375 = vst [vmem:[#allocation5 + $0x1c0] sm:$0xff] 0.0
          %376 = vst [vmem:[#allocation5 + $0x1c8] sm:$0xff] 0.0
          %377 = vst [vmem:[#allocation5 + $0x1d0] sm:$0xff] 0.0
          %378 = vst [vmem:[#allocation5 + $0x1d8] sm:$0xff] 0.0
          %379 = vst [vmem:[#allocation5 + $0x1e0] sm:$0xff] 0.0
          %380 = vst [vmem:[#allocation5 + $0x1e8] sm:$0xff] 0.0
          %381 = vst [vmem:[#allocation5 + $0x1f0] sm:$0xff] 0.0
          %382 = vst [vmem:[#allocation5 + $0x1f8] sm:$0xff] 0.0
        $region52: #{tpu_custom_call.1} parent=35 // pred_fallthru
          _
        // Predicated region
        $region53: #{tpu_custom_call.1} parent=35 // pred_check
          %p383 = pneg %p314
        $region54: #{tpu_custom_call.1} parent=35 // pred_check_branch
          %385 = sbr.rel (%p383) target = $region56
        $region55: #{tpu_custom_call.1} parent=35 // pred_region
          %v386 = vld [vmem:[%s259] sm:$0xff]
          %v387 = vld [vmem:[%s259 + $0x8] sm:$0xff]
          %v388 = vld [vmem:[%s259 + $0x10] sm:$0xff]
          %v389 = vld [vmem:[%s259 + $0x18] sm:$0xff]
          %v390 = vld [vmem:[%s259 + $0x20] sm:$0xff]
          %v391 = vld [vmem:[%s259 + $0x28] sm:$0xff]
          %v392 = vld [vmem:[%s259 + $0x30] sm:$0xff]
          %v393 = vld [vmem:[%s259 + $0x38] sm:$0xff]
          %v394 = vld [vmem:[%s259 + $0x40] sm:$0xff]
          %v395 = vld [vmem:[%s259 + $0x48] sm:$0xff]
          %v396 = vld [vmem:[%s259 + $0x50] sm:$0xff]
          %v397 = vld [vmem:[%s259 + $0x58] sm:$0xff]
          %v398 = vld [vmem:[%s259 + $0x60] sm:$0xff]
          %v399 = vld [vmem:[%s259 + $0x68] sm:$0xff]
          %v400 = vld [vmem:[%s259 + $0x70] sm:$0xff]
          %v401 = vld [vmem:[%s259 + $0x78] sm:$0xff]
          %v402 = vld [vmem:[%s259 + $0x80] sm:$0xff]
          %v403 = vld [vmem:[%s259 + $0x88] sm:$0xff]
          %v404 = vld [vmem:[%s259 + $0x90] sm:$0xff]
          %v405 = vld [vmem:[%s259 + $0x98] sm:$0xff]
          %v406 = vld [vmem:[%s259 + $0xa0] sm:$0xff]
          %v407 = vld [vmem:[%s259 + $0xa8] sm:$0xff]
          %v408 = vld [vmem:[%s259 + $0xb0] sm:$0xff]
          %v409 = vld [vmem:[%s259 + $0xb8] sm:$0xff]
          %v410 = vld [vmem:[%s259 + $0xc0] sm:$0xff]
          %v411 = vld [vmem:[%s259 + $0xc8] sm:$0xff]
          %v412 = vld [vmem:[%s259 + $0xd0] sm:$0xff]
          %v413 = vld [vmem:[%s259 + $0xd8] sm:$0xff]
          %v414 = vld [vmem:[%s259 + $0xe0] sm:$0xff]
          %v415 = vld [vmem:[%s259 + $0xe8] sm:$0xff]
          %v416 = vld [vmem:[%s259 + $0xf0] sm:$0xff]
          %v417 = vld [vmem:[%s259 + $0xf8] sm:$0xff]
          %v418 = vld [vmem:[%s268] sm:$0xff]
          %v419 = vld [vmem:[%s268 + $0x8] sm:$0xf]
          %v420 = vld [vmem:[%s268 + $0xc] sm:$0xff]
          %v421 = vld [vmem:[%s268 + $0x14] sm:$0xf]
          %v422 = vld [vmem:[%s268 + $0x18] sm:$0xff]
          %v423 = vld [vmem:[%s268 + $0x20] sm:$0xf]
          %v424 = vld [vmem:[%s268 + $0x24] sm:$0xff]
          %v425 = vld [vmem:[%s268 + $0x2c] sm:$0xf]
          %v426 = vld [vmem:[%s268 + $0x30] sm:$0xff]
          %v427 = vld [vmem:[%s268 + $0x38] sm:$0xf]
          %v428 = vld [vmem:[%s268 + $0x3c] sm:$0xff]
          %v429 = vld [vmem:[%s268 + $0x44] sm:$0xf]
          %v430 = vld [vmem:[%s268 + $0x48] sm:$0xff]
          %v431 = vld [vmem:[%s268 + $0x50] sm:$0xf]
          %v432 = vld [vmem:[%s268 + $0x54] sm:$0xff]
          %v433 = vld [vmem:[%s268 + $0x5c] sm:$0xf]
          %v434 = vld [vmem:[%s268 + $0x60] sm:$0xff]
          %v435 = vld [vmem:[%s268 + $0x68] sm:$0xf]
          %v436 = vld [vmem:[%s268 + $0x6c] sm:$0xff]
          %v437 = vld [vmem:[%s268 + $0x74] sm:$0xf]
          %v438 = vld [vmem:[%s268 + $0x78] sm:$0xff]
          %v439 = vld [vmem:[%s268 + $0x80] sm:$0xf]
          %v440 = vld [vmem:[%s268 + $0x84] sm:$0xff]
          %v441 = vld [vmem:[%s268 + $0x8c] sm:$0xf]
          %v442 = vld [vmem:[%s268 + $0x90] sm:$0xff]
          %v443 = vld [vmem:[%s268 + $0x98] sm:$0xf]
          %v444 = vld [vmem:[%s268 + $0x9c] sm:$0xff]
          %v445 = vld [vmem:[%s268 + $0xa4] sm:$0xf]
          %v446 = vld [vmem:[%s268 + $0xa8] sm:$0xff]
          %v447 = vld [vmem:[%s268 + $0xb0] sm:$0xf]
          %v448 = vld [vmem:[%s268 + $0xb4] sm:$0xff]
          %v449 = vld [vmem:[%s268 + $0xbc] sm:$0xf]
          %v450 = vld [vmem:[%s268 + $0xc0] sm:$0xff]
          %v451 = vld [vmem:[%s268 + $0xc8] sm:$0xf]
          %v452 = vld [vmem:[%s268 + $0xcc] sm:$0xff]
          %v453 = vld [vmem:[%s268 + $0xd4] sm:$0xf]
          %v454 = vld [vmem:[%s268 + $0xd8] sm:$0xff]
          %v455 = vld [vmem:[%s268 + $0xe0] sm:$0xf]
          %v456 = vld [vmem:[%s268 + $0xe4] sm:$0xff]
          %v457 = vld [vmem:[%s268 + $0xec] sm:$0xf]
          %v458 = vld [vmem:[%s268 + $0xf0] sm:$0xff]
          %v459 = vld [vmem:[%s268 + $0xf8] sm:$0xf]
          %v460 = vld [vmem:[%s268 + $0xfc] sm:$0xff]
          %v461 = vld [vmem:[%s268 + $0x104] sm:$0xf]
          %v462 = vld [vmem:[%s268 + $0x108] sm:$0xff]
          %v463 = vld [vmem:[%s268 + $0x110] sm:$0xf]
          %v464 = vld [vmem:[%s268 + $0x114] sm:$0xff]
          %v465 = vld [vmem:[%s268 + $0x11c] sm:$0xf]
          %v466 = vld [vmem:[%s268 + $0x120] sm:$0xff]
          %v467 = vld [vmem:[%s268 + $0x128] sm:$0xf]
          %v468 = vld [vmem:[%s268 + $0x12c] sm:$0xff]
          %v469 = vld [vmem:[%s268 + $0x134] sm:$0xf]
          %v470 = vld [vmem:[%s268 + $0x138] sm:$0xff]
          %v471 = vld [vmem:[%s268 + $0x140] sm:$0xf]
          %v472 = vld [vmem:[%s268 + $0x144] sm:$0xff]
          %v473 = vld [vmem:[%s268 + $0x14c] sm:$0xf]
          %v474 = vld [vmem:[%s268 + $0x150] sm:$0xff]
          %v475 = vld [vmem:[%s268 + $0x158] sm:$0xf]
          %v476 = vld [vmem:[%s268 + $0x15c] sm:$0xff]
          %v477 = vld [vmem:[%s268 + $0x164] sm:$0xf]
          %v478 = vld [vmem:[%s268 + $0x168] sm:$0xff]
          %v479 = vld [vmem:[%s268 + $0x170] sm:$0xf]
          %v480 = vld [vmem:[%s268 + $0x174] sm:$0xff]
          %v481 = vld [vmem:[%s268 + $0x17c] sm:$0xf]
          %v514 = vunpack.c.l.b16 %v386
          %v515 = vunpack.c.h.b16 %v386
          %v516 = vunpack.c.l.b16 %v387
          %v517 = vunpack.c.h.b16 %v387
          %v518 = vunpack.c.l.b16 %v388
          %v519 = vunpack.c.h.b16 %v388
          %v520 = vunpack.c.l.b16 %v389
          %v521 = vunpack.c.h.b16 %v389
          %v522 = vunpack.c.l.b16 %v390
          %v523 = vunpack.c.h.b16 %v390
          %v524 = vunpack.c.l.b16 %v391
          %v525 = vunpack.c.h.b16 %v391
          %v526 = vunpack.c.l.b16 %v392
          %v527 = vunpack.c.h.b16 %v392
          %v528 = vunpack.c.l.b16 %v393
          %v529 = vunpack.c.h.b16 %v393
          %v530 = vunpack.c.l.b16 %v394
          %v531 = vunpack.c.h.b16 %v394
          %v532 = vunpack.c.l.b16 %v395
          %v533 = vunpack.c.h.b16 %v395
          %v534 = vunpack.c.l.b16 %v396
          %v535 = vunpack.c.h.b16 %v396
          %v536 = vunpack.c.l.b16 %v397
          %v537 = vunpack.c.h.b16 %v397
          %v538 = vunpack.c.l.b16 %v398
          %v539 = vunpack.c.h.b16 %v398
          %v540 = vunpack.c.l.b16 %v399
          %v541 = vunpack.c.h.b16 %v399
          %v542 = vunpack.c.l.b16 %v400
          %v543 = vunpack.c.h.b16 %v400
          %v544 = vunpack.c.l.b16 %v401
          %v545 = vunpack.c.h.b16 %v401
          %v546 = vunpack.c.l.b16 %v402
          %v547 = vunpack.c.h.b16 %v402
          %v548 = vunpack.c.l.b16 %v403
          %v549 = vunpack.c.h.b16 %v403
          %v550 = vunpack.c.l.b16 %v404
          %v551 = vunpack.c.h.b16 %v404
          %v552 = vunpack.c.l.b16 %v405
          %v553 = vunpack.c.h.b16 %v405
          %v554 = vunpack.c.l.b16 %v406
          %v555 = vunpack.c.h.b16 %v406
          %v556 = vunpack.c.l.b16 %v407
          %v557 = vunpack.c.h.b16 %v407
          %v558 = vunpack.c.l.b16 %v408
          %v559 = vunpack.c.h.b16 %v408
          %v560 = vunpack.c.l.b16 %v409
          %v561 = vunpack.c.h.b16 %v409
          %v562 = vunpack.c.l.b16 %v410
          %v563 = vunpack.c.h.b16 %v410
          %v564 = vunpack.c.l.b16 %v411
          %v565 = vunpack.c.h.b16 %v411
          %v566 = vunpack.c.l.b16 %v412
          %v567 = vunpack.c.h.b16 %v412
          %v568 = vunpack.c.l.b16 %v413
          %v569 = vunpack.c.h.b16 %v413
          %v570 = vunpack.c.l.b16 %v414
          %v571 = vunpack.c.h.b16 %v414
          %v572 = vunpack.c.l.b16 %v415
          %v573 = vunpack.c.h.b16 %v415
          %v574 = vunpack.c.l.b16 %v416
          %v575 = vunpack.c.h.b16 %v416
          %v576 = vunpack.c.l.b16 %v417
          %v577 = vunpack.c.h.b16 %v417
          %v578 = vpack.c.b16 %v516, %v514
          %v579 = vpack.c.b16 %v517, %v515
          %v580 = vpack.c.b16 %v520, %v518
          %v581 = vpack.c.b16 %v521, %v519
          %v582 = vpack.c.b16 %v524, %v522
          %v583 = vpack.c.b16 %v525, %v523
          %v584 = vpack.c.b16 %v528, %v526
          %v585 = vpack.c.b16 %v529, %v527
          %v586 = vpack.c.b16 %v532, %v530
          %v587 = vpack.c.b16 %v533, %v531
          %v588 = vpack.c.b16 %v536, %v534
          %v589 = vpack.c.b16 %v537, %v535
          %v590 = vpack.c.b16 %v540, %v538
          %v591 = vpack.c.b16 %v541, %v539
          %v592 = vpack.c.b16 %v544, %v542
          %v593 = vpack.c.b16 %v545, %v543
          %v594 = vpack.c.b16 %v548, %v546
          %v595 = vpack.c.b16 %v549, %v547
          %v596 = vpack.c.b16 %v552, %v550
          %v597 = vpack.c.b16 %v553, %v551
          %v598 = vpack.c.b16 %v556, %v554
          %v599 = vpack.c.b16 %v557, %v555
          %v600 = vpack.c.b16 %v560, %v558
          %v601 = vpack.c.b16 %v561, %v559
          %v602 = vpack.c.b16 %v564, %v562
          %v603 = vpack.c.b16 %v565, %v563
          %v604 = vpack.c.b16 %v568, %v566
          %v605 = vpack.c.b16 %v569, %v567
          %v606 = vpack.c.b16 %v572, %v570
          %v607 = vpack.c.b16 %v573, %v571
          %v608 = vpack.c.b16 %v576, %v574
          %v609 = vpack.c.b16 %v577, %v575
          %v706 = vunpack.c.l.b16 %v418
          %v707 = vunpack.c.h.b16 %v418
          %v708 = vunpack.c.l.b16 %v419
          %v709 = vunpack.c.l.b16 %v420
          %v710 = vunpack.c.h.b16 %v420
          %v711 = vunpack.c.l.b16 %v421
          %v712 = vunpack.c.l.b16 %v422
          %v713 = vunpack.c.h.b16 %v422
          %v714 = vunpack.c.l.b16 %v423
          %v715 = vunpack.c.l.b16 %v424
          %v716 = vunpack.c.h.b16 %v424
          %v717 = vunpack.c.l.b16 %v425
          %v718 = vunpack.c.l.b16 %v426
          %v719 = vunpack.c.h.b16 %v426
          %v720 = vunpack.c.l.b16 %v427
          %v721 = vunpack.c.l.b16 %v428
          %v722 = vunpack.c.h.b16 %v428
          %v723 = vunpack.c.l.b16 %v429
          %v724 = vunpack.c.l.b16 %v430
          %v725 = vunpack.c.h.b16 %v430
          %v726 = vunpack.c.l.b16 %v431
          %v727 = vunpack.c.l.b16 %v432
          %v728 = vunpack.c.h.b16 %v432
          %v729 = vunpack.c.l.b16 %v433
          %v730 = vunpack.c.l.b16 %v434
          %v731 = vunpack.c.h.b16 %v434
          %v732 = vunpack.c.l.b16 %v435
          %v733 = vunpack.c.l.b16 %v436
          %v734 = vunpack.c.h.b16 %v436
          %v735 = vunpack.c.l.b16 %v437
          %v736 = vunpack.c.l.b16 %v438
          %v737 = vunpack.c.h.b16 %v438
          %v738 = vunpack.c.l.b16 %v439
          %v739 = vunpack.c.l.b16 %v440
          %v740 = vunpack.c.h.b16 %v440
          %v741 = vunpack.c.l.b16 %v441
          %v742 = vunpack.c.l.b16 %v442
          %v743 = vunpack.c.h.b16 %v442
          %v744 = vunpack.c.l.b16 %v443
          %v745 = vunpack.c.l.b16 %v444
          %v746 = vunpack.c.h.b16 %v444
          %v747 = vunpack.c.l.b16 %v445
          %v748 = vunpack.c.l.b16 %v446
          %v749 = vunpack.c.h.b16 %v446
          %v750 = vunpack.c.l.b16 %v447
          %v751 = vunpack.c.l.b16 %v448
          %v752 = vunpack.c.h.b16 %v448
          %v753 = vunpack.c.l.b16 %v449
          %v754 = vunpack.c.l.b16 %v450
          %v755 = vunpack.c.h.b16 %v450
          %v756 = vunpack.c.l.b16 %v451
          %v757 = vunpack.c.l.b16 %v452
          %v758 = vunpack.c.h.b16 %v452
          %v759 = vunpack.c.l.b16 %v453
          %v760 = vunpack.c.l.b16 %v454
          %v761 = vunpack.c.h.b16 %v454
          %v762 = vunpack.c.l.b16 %v455
          %v763 = vunpack.c.l.b16 %v456
          %v764 = vunpack.c.h.b16 %v456
          %v765 = vunpack.c.l.b16 %v457
          %v766 = vunpack.c.l.b16 %v458
          %v767 = vunpack.c.h.b16 %v458
          %v768 = vunpack.c.l.b16 %v459
          %v769 = vunpack.c.l.b16 %v460
          %v770 = vunpack.c.h.b16 %v460
          %v771 = vunpack.c.l.b16 %v461
          %v772 = vunpack.c.l.b16 %v462
          %v773 = vunpack.c.h.b16 %v462
          %v774 = vunpack.c.l.b16 %v463
          %v775 = vunpack.c.l.b16 %v464
          %v776 = vunpack.c.h.b16 %v464
          %v777 = vunpack.c.l.b16 %v465
          %v778 = vunpack.c.l.b16 %v466
          %v779 = vunpack.c.h.b16 %v466
          %v780 = vunpack.c.l.b16 %v467
          %v781 = vunpack.c.l.b16 %v468
          %v782 = vunpack.c.h.b16 %v468
          %v783 = vunpack.c.l.b16 %v469
          %v784 = vunpack.c.l.b16 %v470
          %v785 = vunpack.c.h.b16 %v470
          %v786 = vunpack.c.l.b16 %v471
          %v787 = vunpack.c.l.b16 %v472
          %v788 = vunpack.c.h.b16 %v472
          %v789 = vunpack.c.l.b16 %v473
          %v790 = vunpack.c.l.b16 %v474
          %v791 = vunpack.c.h.b16 %v474
          %v792 = vunpack.c.l.b16 %v475
          %v793 = vunpack.c.l.b16 %v476
          %v794 = vunpack.c.h.b16 %v476
          %v795 = vunpack.c.l.b16 %v477
          %v796 = vunpack.c.l.b16 %v478
          %v797 = vunpack.c.h.b16 %v478
          %v798 = vunpack.c.l.b16 %v479
          %v799 = vunpack.c.l.b16 %v480
          %v800 = vunpack.c.h.b16 %v480
          %v801 = vunpack.c.l.b16 %v481
          %v802 = vpack.c.b16 %v709, %v706
          %v803 = vpack.c.b16 %v710, %v707
          %v804 = vpack.c.b16 %v711, %v708
          %v805 = vpack.c.b16 %v715, %v712
          %v806 = vpack.c.b16 %v716, %v713
          %v807 = vpack.c.b16 %v717, %v714
          %v808 = vpack.c.b16 %v721, %v718
          %v809 = vpack.c.b16 %v722, %v719
          %v810 = vpack.c.b16 %v723, %v720
          %v811 = vpack.c.b16 %v727, %v724
          %v812 = vpack.c.b16 %v728, %v725
          %v813 = vpack.c.b16 %v729, %v726
          %v814 = vpack.c.b16 %v733, %v730
          %v815 = vpack.c.b16 %v734, %v731
          %v816 = vpack.c.b16 %v735, %v732
          %v817 = vpack.c.b16 %v739, %v736
          %v818 = vpack.c.b16 %v740, %v737
          %v819 = vpack.c.b16 %v741, %v738
          %v820 = vpack.c.b16 %v745, %v742
          %v821 = vpack.c.b16 %v746, %v743
          %v822 = vpack.c.b16 %v747, %v744
          %v823 = vpack.c.b16 %v751, %v748
          %v824 = vpack.c.b16 %v752, %v749
          %v825 = vpack.c.b16 %v753, %v750
          %v826 = vpack.c.b16 %v757, %v754
          %v827 = vpack.c.b16 %v758, %v755
          %v828 = vpack.c.b16 %v759, %v756
          %v829 = vpack.c.b16 %v763, %v760
          %v830 = vpack.c.b16 %v764, %v761
          %v831 = vpack.c.b16 %v765, %v762
          %v832 = vpack.c.b16 %v769, %v766
          %v833 = vpack.c.b16 %v770, %v767
          %v834 = vpack.c.b16 %v771, %v768
          %v835 = vpack.c.b16 %v775, %v772
          %v836 = vpack.c.b16 %v776, %v773
          %v837 = vpack.c.b16 %v777, %v774
          %v838 = vpack.c.b16 %v781, %v778
          %v839 = vpack.c.b16 %v782, %v779
          %v840 = vpack.c.b16 %v783, %v780
          %v841 = vpack.c.b16 %v787, %v784
          %v842 = vpack.c.b16 %v788, %v785
          %v843 = vpack.c.b16 %v789, %v786
          %v844 = vpack.c.b16 %v793, %v790
          %v845 = vpack.c.b16 %v794, %v791
          %v846 = vpack.c.b16 %v795, %v792
          %v847 = vpack.c.b16 %v799, %v796
          %v848 = vpack.c.b16 %v800, %v797
          %v849 = vpack.c.b16 %v801, %v798
          %898 = vmatprep.subr.bf16.mxu0 %v803
          %899 = vmatpush1.bf16.msra.mxu0 %v802
          %900 = vmatprep.subr.bf16.mxu0 %v806
          %901 = vmatpush1.bf16.msra.mxu0 %v805
          %902 = vmatprep.subr.bf16.mxu0 %v809
          %903 = vmatpush1.bf16.msra.mxu0 %v808
          %904 = vmatprep.subr.bf16.mxu0 %v812
          %905 = vmatpush1.bf16.msra.mxu0 %v811
          %906 = vmatprep.subr.bf16.mxu0 %v815
          %907 = vmatpush1.bf16.msra.mxu0 %v814
          %908 = vmatprep.subr.bf16.mxu0 %v818
          %909 = vmatpush1.bf16.msra.mxu0 %v817
          %910 = vmatprep.subr.bf16.mxu0 %v821
          %911 = vmatpush1.bf16.msra.mxu0 %v820
          %912 = vmatprep.subr.bf16.mxu0 %v824
          %913 = vmatpush1.bf16.msra.mxu0 %v823
          %914 = vmatprep.subr.bf16.mxu0 %v827
          %915 = vmatpush1.bf16.msra.mxu0 %v826
          %916 = vmatprep.subr.bf16.mxu0 %v830
          %917 = vmatpush1.bf16.msra.mxu0 %v829
          %918 = vmatprep.subr.bf16.mxu0 %v833
          %919 = vmatpush1.bf16.msra.mxu0 %v832
          %920 = vmatprep.subr.bf16.mxu0 %v836
          %921 = vmatpush1.bf16.msra.mxu0 %v835
          %922 = vmatprep.subr.bf16.mxu0 %v839
          %923 = vmatpush1.bf16.msra.mxu0 %v838
          %924 = vmatprep.subr.bf16.mxu0 %v842
          %925 = vmatpush1.bf16.msra.mxu0 %v841
          %926 = vmatprep.subr.bf16.mxu0 %v845
          %927 = vmatpush1.bf16.msra.mxu0 %v844
          %928 = vmatprep.subr.bf16.mxu0 %v848
          %929 = vmatpush1.bf16.msra.mxu0 %v847
          %930 = vmatprep.mubr.bf16.mxu0 %v579
          %931 = vmatmul.mubr.bf16.gmra.mrb[0].mxu0 %v578
          %v932 = vpop.f32.mrb[0].mxu0
          %v933 = vadd.f32 0.0, %v932
          %v934 = vpop.f32.mrb[0].mxu0
          %v935 = vadd.f32 0.0, %v934
          %v936 = vpop.f32.mrb[0].mxu0
          %v937 = vadd.f32 0.0, %v936
          %v938 = vpop.f32.mrb[0].mxu0
          %v939 = vadd.f32 0.0, %v938
          %940 = vmatprep.mubr.bf16.mxu0 %v581
          %941 = vmatmul.mubr.bf16.gmra.mrb[0].mxu0 %v580
          %v942 = vpop.f32.mrb[0].mxu0
          %v943 = vadd.f32 0.0, %v942
          %v944 = vpop.f32.mrb[0].mxu0
          %v945 = vadd.f32 0.0, %v944
          %v946 = vpop.f32.mrb[0].mxu0
          %v947 = vadd.f32 0.0, %v946
          %v948 = vpop.f32.mrb[0].mxu0
          %v949 = vadd.f32 0.0, %v948
          %950 = vmatprep.mubr.bf16.mxu0 %v583
          %951 = vmatmul.mubr.bf16.gmra.mrb[0].mxu0 %v582
          %v952 = vpop.f32.mrb[0].mxu0
          %v953 = vadd.f32 0.0, %v952
          %v954 = vpop.f32.mrb[0].mxu0
          %v955 = vadd.f32 0.0, %v954
          %v956 = vpop.f32.mrb[0].mxu0
          %v957 = vadd.f32 0.0, %v956
          %v958 = vpop.f32.mrb[0].mxu0
          %v959 = vadd.f32 0.0, %v958
          %960 = vmatprep.mubr.bf16.mxu0 %v585
          %961 = vmatmul.mubr.bf16.gmra.mrb[0].mxu0 %v584
          %v962 = vpop.f32.mrb[0].mxu0
          %v963 = vadd.f32 0.0, %v962
          %v964 = vpop.f32.mrb[0].mxu0
          %v965 = vadd.f32 0.0, %v964
          %v966 = vpop.f32.mrb[0].mxu0
          %v967 = vadd.f32 0.0, %v966
          %v968 = vpop.f32.mrb[0].mxu0
          %v969 = vadd.f32 0.0, %v968
          %970 = vmatprep.mubr.bf16.mxu0 %v587
          %971 = vmatmul.mubr.bf16.gmra.mrb[0].mxu0 %v586
          %v972 = vpop.f32.mrb[0].mxu0
          %v973 = vadd.f32 0.0, %v972
          %v974 = vpop.f32.mrb[0].mxu0
          %v975 = vadd.f32 0.0, %v974
          %v976 = vpop.f32.mrb[0].mxu0
          %v977 = vadd.f32 0.0, %v976
          %v978 = vpop.f32.mrb[0].mxu0
          %v979 = vadd.f32 0.0, %v978
          %980 = vmatprep.mubr.bf16.mxu0 %v589
          %981 = vmatmul.mubr.bf16.gmra.mrb[0].mxu0 %v588
          %v982 = vpop.f32.mrb[0].mxu0
          %v983 = vadd.f32 0.0, %v982
          %v984 = vpop.f32.mrb[0].mxu0
          %v985 = vadd.f32 0.0, %v984
          %v986 = vpop.f32.mrb[0].mxu0
          %v987 = vadd.f32 0.0, %v986
          %v988 = vpop.f32.mrb[0].mxu0
          %v989 = vadd.f32 0.0, %v988
          %990 = vmatprep.mubr.bf16.mxu0 %v591
          %991 = vmatmul.mubr.bf16.gmra.mrb[0].mxu0 %v590
          %v992 = vpop.f32.mrb[0].mxu0
          %v993 = vadd.f32 0.0, %v992
          %v994 = vpop.f32.mrb[0].mxu0
          %v995 = vadd.f32 0.0, %v994
          %v996 = vpop.f32.mrb[0].mxu0
          %v997 = vadd.f32 0.0, %v996
          %v998 = vpop.f32.mrb[0].mxu0
          %v999 = vadd.f32 0.0, %v998
          %1000 = vmatprep.mubr.bf16.mxu0 %v593
          %1001 = vmatmul.mubr.bf16.gmra.mrb[0].mxu0 %v592
          %v1002 = vpop.f32.mrb[0].mxu0
          %v1003 = vadd.f32 0.0, %v1002
          %v1004 = vpop.f32.mrb[0].mxu0
          %v1005 = vadd.f32 0.0, %v1004
          %v1006 = vpop.f32.mrb[0].mxu0
          %v1007 = vadd.f32 0.0, %v1006
          %v1008 = vpop.f32.mrb[0].mxu0
          %v1009 = vadd.f32 0.0, %v1008
          %1010 = vmatprep.mubr.bf16.mxu0 %v595
          %1011 = vmatmul.mubr.bf16.gmra.mrb[0].mxu0 %v594
          %v1012 = vpop.f32.mrb[0].mxu0
          %v1013 = vadd.f32 0.0, %v1012
          %v1014 = vpop.f32.mrb[0].mxu0
          %v1015 = vadd.f32 0.0, %v1014
          %v1016 = vpop.f32.mrb[0].mxu0
          %v1017 = vadd.f32 0.0, %v1016
          %v1018 = vpop.f32.mrb[0].mxu0
          %v1019 = vadd.f32 0.0, %v1018
          %1020 = vmatprep.mubr.bf16.mxu0 %v597
          %1021 = vmatmul.mubr.bf16.gmra.mrb[0].mxu0 %v596
          %v1022 = vpop.f32.mrb[0].mxu0
          %v1023 = vadd.f32 0.0, %v1022
          %v1024 = vpop.f32.mrb[0].mxu0
          %v1025 = vadd.f32 0.0, %v1024
          %v1026 = vpop.f32.mrb[0].mxu0
          %v1027 = vadd.f32 0.0, %v1026
          %v1028 = vpop.f32.mrb[0].mxu0
          %v1029 = vadd.f32 0.0, %v1028
          %1030 = vmatprep.mubr.bf16.mxu0 %v599
          %1031 = vmatmul.mubr.bf16.gmra.mrb[0].mxu0 %v598
          %v1032 = vpop.f32.mrb[0].mxu0
          %v1033 = vadd.f32 0.0, %v1032
          %v1034 = vpop.f32.mrb[0].mxu0
          %v1035 = vadd.f32 0.0, %v1034
          %v1036 = vpop.f32.mrb[0].mxu0
          %v1037 = vadd.f32 0.0, %v1036
          %v1038 = vpop.f32.mrb[0].mxu0
          %v1039 = vadd.f32 0.0, %v1038
          %1040 = vmatprep.mubr.bf16.mxu0 %v601
          %1041 = vmatmul.mubr.bf16.gmra.mrb[0].mxu0 %v600
          %v1042 = vpop.f32.mrb[0].mxu0
          %v1043 = vadd.f32 0.0, %v1042
          %v1044 = vpop.f32.mrb[0].mxu0
          %v1045 = vadd.f32 0.0, %v1044
          %v1046 = vpop.f32.mrb[0].mxu0
          %v1047 = vadd.f32 0.0, %v1046
          %v1048 = vpop.f32.mrb[0].mxu0
          %v1049 = vadd.f32 0.0, %v1048
          %1050 = vmatprep.mubr.bf16.mxu0 %v603
          %1051 = vmatmul.mubr.bf16.gmra.mrb[0].mxu0 %v602
          %v1052 = vpop.f32.mrb[0].mxu0
          %v1053 = vadd.f32 0.0, %v1052
          %v1054 = vpop.f32.mrb[0].mxu0
          %v1055 = vadd.f32 0.0, %v1054
          %v1056 = vpop.f32.mrb[0].mxu0
          %v1057 = vadd.f32 0.0, %v1056
          %v1058 = vpop.f32.mrb[0].mxu0
          %v1059 = vadd.f32 0.0, %v1058
          %1060 = vmatprep.mubr.bf16.mxu0 %v605
          %1061 = vmatmul.mubr.bf16.gmra.mrb[0].mxu0 %v604
          %v1062 = vpop.f32.mrb[0].mxu0
          %v1063 = vadd.f32 0.0, %v1062
          %v1064 = vpop.f32.mrb[0].mxu0
          %v1065 = vadd.f32 0.0, %v1064
          %v1066 = vpop.f32.mrb[0].mxu0
          %v1067 = vadd.f32 0.0, %v1066
          %v1068 = vpop.f32.mrb[0].mxu0
          %v1069 = vadd.f32 0.0, %v1068
          %1070 = vmatprep.mubr.bf16.mxu0 %v607
          %1071 = vmatmul.mubr.bf16.gmra.mrb[0].mxu0 %v606
          %v1072 = vpop.f32.mrb[0].mxu0
          %v1073 = vadd.f32 0.0, %v1072
          %v1074 = vpop.f32.mrb[0].mxu0
          %v1075 = vadd.f32 0.0, %v1074
          %v1076 = vpop.f32.mrb[0].mxu0
          %v1077 = vadd.f32 0.0, %v1076
          %v1078 = vpop.f32.mrb[0].mxu0
          %v1079 = vadd.f32 0.0, %v1078
          %1080 = vmatprep.mubr.bf16.mxu0 %v609
          %1081 = vmatmul.mubr.bf16.gmra.mrb[0].mxu0 %v608
          %v1082 = vpop.f32.mrb[0].mxu0
          %v1083 = vadd.f32 0.0, %v1082
          %v1084 = vpop.f32.mrb[0].mxu0
          %v1085 = vadd.f32 0.0, %v1084
          %v1086 = vpop.f32.mrb[0].mxu0
          %v1087 = vadd.f32 0.0, %v1086
          %v1088 = vpop.f32.mrb[0].mxu0
          %v1089 = vadd.f32 0.0, %v1088
          %1090 = vdwg.mxu0
          %1091 = vmatprep.subr.bf16.mxu0 0
          %1092 = vmatpush1.bf16.msra.mxu0 %v804
          %1093 = vmatprep.subr.bf16.mxu0 0
          %1094 = vmatpush1.bf16.msra.mxu0 %v807
          %1095 = vmatprep.subr.bf16.mxu0 0
          %1096 = vmatpush1.bf16.msra.mxu0 %v810
          %1097 = vmatprep.subr.bf16.mxu0 0
          %1098 = vmatpush1.bf16.msra.mxu0 %v813
          %1099 = vmatprep.subr.bf16.mxu0 0
          %1100 = vmatpush1.bf16.msra.mxu0 %v816
          %1101 = vmatprep.subr.bf16.mxu0 0
          %1102 = vmatpush1.bf16.msra.mxu0 %v819
          %1103 = vmatprep.subr.bf16.mxu0 0
          %1104 = vmatpush1.bf16.msra.mxu0 %v822
          %1105 = vmatprep.subr.bf16.mxu0 0
          %1106 = vmatpush1.bf16.msra.mxu0 %v825
          %1107 = vmatprep.subr.bf16.mxu0 0
          %1108 = vmatpush1.bf16.msra.mxu0 %v828
          %1109 = vmatprep.subr.bf16.mxu0 0
          %1110 = vmatpush1.bf16.msra.mxu0 %v831
          %1111 = vmatprep.subr.bf16.mxu0 0
          %1112 = vmatpush1.bf16.msra.mxu0 %v834
          %1113 = vmatprep.subr.bf16.mxu0 0
          %1114 = vmatpush1.bf16.msra.mxu0 %v837
          %1115 = vmatprep.subr.bf16.mxu0 0
          %1116 = vmatpush1.bf16.msra.mxu0 %v840
          %1117 = vmatprep.subr.bf16.mxu0 0
          %1118 = vmatpush1.bf16.msra.mxu0 %v843
          %1119 = vmatprep.subr.bf16.mxu0 0
          %1120 = vmatpush1.bf16.msra.mxu0 %v846
          %1121 = vmatprep.subr.bf16.mxu0 0
          %1122 = vmatpush1.bf16.msra.mxu0 %v849
          %1123 = vmatprep.mubr.bf16.mxu0 %v579
          %1124 = vmatmul.mubr.bf16.gmra.mrb[0].mxu0 %v578
          %v1125 = vpop.f32.mrb[0].mxu0
          %v1126 = vadd.f32 0.0, %v1125
          %v1127 = vpop.f32.mrb[0].mxu0
          %v1128 = vpop.f32.mrb[0].mxu0
          %v1129 = vadd.f32 0.0, %v1128
          %v1130 = vpop.f32.mrb[0].mxu0
          %1131 = vmatprep.mubr.bf16.mxu0 %v581
          %1132 = vmatmul.mubr.bf16.gmra.mrb[0].mxu0 %v580
          %v1133 = vpop.f32.mrb[0].mxu0
          %v1134 = vadd.f32 0.0, %v1133
          %v1135 = vpop.f32.mrb[0].mxu0
          %v1136 = vpop.f32.mrb[0].mxu0
          %v1137 = vadd.f32 0.0, %v1136
          %v1138 = vpop.f32.mrb[0].mxu0
          %1139 = vmatprep.mubr.bf16.mxu0 %v583
          %1140 = vmatmul.mubr.bf16.gmra.mrb[0].mxu0 %v582
          %v1141 = vpop.f32.mrb[0].mxu0
          %v1142 = vadd.f32 0.0, %v1141
          %v1143 = vpop.f32.mrb[0].mxu0
          %v1144 = vpop.f32.mrb[0].mxu0
          %v1145 = vadd.f32 0.0, %v1144
          %v1146 = vpop.f32.mrb[0].mxu0
          %1147 = vmatprep.mubr.bf16.mxu0 %v585
          %1148 = vmatmul.mubr.bf16.gmra.mrb[0].mxu0 %v584
          %v1149 = vpop.f32.mrb[0].mxu0
          %v1150 = vadd.f32 0.0, %v1149
          %v1151 = vpop.f32.mrb[0].mxu0
          %v1152 = vpop.f32.mrb[0].mxu0
          %v1153 = vadd.f32 0.0, %v1152
          %v1154 = vpop.f32.mrb[0].mxu0
          %1155 = vmatprep.mubr.bf16.mxu0 %v587
          %1156 = vmatmul.mubr.bf16.gmra.mrb[0].mxu0 %v586
          %v1157 = vpop.f32.mrb[0].mxu0
          %v1158 = vadd.f32 0.0, %v1157
          %v1159 = vpop.f32.mrb[0].mxu0
          %v1160 = vpop.f32.mrb[0].mxu0
          %v1161 = vadd.f32 0.0, %v1160
          %v1162 = vpop.f32.mrb[0].mxu0
          %1163 = vmatprep.mubr.bf16.mxu0 %v589
          %1164 = vmatmul.mubr.bf16.gmra.mrb[0].mxu0 %v588
          %v1165 = vpop.f32.mrb[0].mxu0
          %v1166 = vadd.f32 0.0, %v1165
          %v1167 = vpop.f32.mrb[0].mxu0
          %v1168 = vpop.f32.mrb[0].mxu0
          %v1169 = vadd.f32 0.0, %v1168
          %v1170 = vpop.f32.mrb[0].mxu0
          %1171 = vmatprep.mubr.bf16.mxu0 %v591
          %1172 = vmatmul.mubr.bf16.gmra.mrb[0].mxu0 %v590
          %v1173 = vpop.f32.mrb[0].mxu0
          %v1174 = vadd.f32 0.0, %v1173
          %v1175 = vpop.f32.mrb[0].mxu0
          %v1176 = vpop.f32.mrb[0].mxu0
          %v1177 = vadd.f32 0.0, %v1176
          %v1178 = vpop.f32.mrb[0].mxu0
          %1179 = vmatprep.mubr.bf16.mxu0 %v593
          %1180 = vmatmul.mubr.bf16.gmra.mrb[0].mxu0 %v592
          %v1181 = vpop.f32.mrb[0].mxu0
          %v1182 = vadd.f32 0.0, %v1181
          %v1183 = vpop.f32.mrb[0].mxu0
          %v1184 = vpop.f32.mrb[0].mxu0
          %v1185 = vadd.f32 0.0, %v1184
          %v1186 = vpop.f32.mrb[0].mxu0
          %1187 = vmatprep.mubr.bf16.mxu0 %v595
          %1188 = vmatmul.mubr.bf16.gmra.mrb[0].mxu0 %v594
          %v1189 = vpop.f32.mrb[0].mxu0
          %v1190 = vadd.f32 0.0, %v1189
          %v1191 = vpop.f32.mrb[0].mxu0
          %v1192 = vpop.f32.mrb[0].mxu0
          %v1193 = vadd.f32 0.0, %v1192
          %v1194 = vpop.f32.mrb[0].mxu0
          %1195 = vmatprep.mubr.bf16.mxu0 %v597
          %1196 = vmatmul.mubr.bf16.gmra.mrb[0].mxu0 %v596
          %v1197 = vpop.f32.mrb[0].mxu0
          %v1198 = vadd.f32 0.0, %v1197
          %v1199 = vpop.f32.mrb[0].mxu0
          %v1200 = vpop.f32.mrb[0].mxu0
          %v1201 = vadd.f32 0.0, %v1200
          %v1202 = vpop.f32.mrb[0].mxu0
          %1203 = vmatprep.mubr.bf16.mxu0 %v599
          %1204 = vmatmul.mubr.bf16.gmra.mrb[0].mxu0 %v598
          %v1205 = vpop.f32.mrb[0].mxu0
          %v1206 = vadd.f32 0.0, %v1205
          %v1207 = vpop.f32.mrb[0].mxu0
          %v1208 = vpop.f32.mrb[0].mxu0
          %v1209 = vadd.f32 0.0, %v1208
          %v1210 = vpop.f32.mrb[0].mxu0
          %1211 = vmatprep.mubr.bf16.mxu0 %v601
          %1212 = vmatmul.mubr.bf16.gmra.mrb[0].mxu0 %v600
          %v1213 = vpop.f32.mrb[0].mxu0
          %v1214 = vadd.f32 0.0, %v1213
          %v1215 = vpop.f32.mrb[0].mxu0
          %v1216 = vpop.f32.mrb[0].mxu0
          %v1217 = vadd.f32 0.0, %v1216
          %v1218 = vpop.f32.mrb[0].mxu0
          %1219 = vmatprep.mubr.bf16.mxu0 %v603
          %1220 = vmatmul.mubr.bf16.gmra.mrb[0].mxu0 %v602
          %v1221 = vpop.f32.mrb[0].mxu0
          %v1222 = vadd.f32 0.0, %v1221
          %v1223 = vpop.f32.mrb[0].mxu0
          %v1224 = vpop.f32.mrb[0].mxu0
          %v1225 = vadd.f32 0.0, %v1224
          %v1226 = vpop.f32.mrb[0].mxu0
          %1227 = vmatprep.mubr.bf16.mxu0 %v605
          %1228 = vmatmul.mubr.bf16.gmra.mrb[0].mxu0 %v604
          %v1229 = vpop.f32.mrb[0].mxu0
          %v1230 = vadd.f32 0.0, %v1229
          %v1231 = vpop.f32.mrb[0].mxu0
          %v1232 = vpop.f32.mrb[0].mxu0
          %v1233 = vadd.f32 0.0, %v1232
          %v1234 = vpop.f32.mrb[0].mxu0
          %1235 = vmatprep.mubr.bf16.mxu0 %v607
          %1236 = vmatmul.mubr.bf16.gmra.mrb[0].mxu0 %v606
          %v1237 = vpop.f32.mrb[0].mxu0
          %v1238 = vadd.f32 0.0, %v1237
          %v1239 = vpop.f32.mrb[0].mxu0
          %v1240 = vpop.f32.mrb[0].mxu0
          %v1241 = vadd.f32 0.0, %v1240
          %v1242 = vpop.f32.mrb[0].mxu0
          %1243 = vmatprep.mubr.bf16.mxu0 %v609
          %1244 = vmatmul.mubr.bf16.gmra.mrb[0].mxu0 %v608
          %v1245 = vpop.f32.mrb[0].mxu0
          %v1246 = vadd.f32 0.0, %v1245
          %v1247 = vpop.f32.mrb[0].mxu0
          %v1248 = vpop.f32.mrb[0].mxu0
          %v1249 = vadd.f32 0.0, %v1248
          %v1250 = vpop.f32.mrb[0].mxu0
          %1251 = vdwg.mxu0
          %v1252 = vpack.c.bf16 %v937, %v933
          %v1253 = vpack.c.bf16 %v947, %v943
          %v1254 = vpack.c.bf16 %v957, %v953
          %v1255 = vpack.c.bf16 %v967, %v963
          %v1256 = vpack.c.bf16 %v977, %v973
          %v1257 = vpack.c.bf16 %v987, %v983
          %v1258 = vpack.c.bf16 %v997, %v993
          %v1259 = vpack.c.bf16 %v1007, %v1003
          %v1260 = vpack.c.bf16 %v1017, %v1013
          %v1261 = vpack.c.bf16 %v1027, %v1023
          %v1262 = vpack.c.bf16 %v1037, %v1033
          %v1263 = vpack.c.bf16 %v1047, %v1043
          %v1264 = vpack.c.bf16 %v1057, %v1053
          %v1265 = vpack.c.bf16 %v1067, %v1063
          %v1266 = vpack.c.bf16 %v1077, %v1073
          %v1267 = vpack.c.bf16 %v1087, %v1083
          %1268 = vst [vmem:[#allocation2] sm:$0xff] %v1252
          %1269 = vst [vmem:[#allocation2 + $0x8] sm:$0xff] %v1253
          %1270 = vst [vmem:[#allocation2 + $0x10] sm:$0xff] %v1254
          %1271 = vst [vmem:[#allocation2 + $0x18] sm:$0xff] %v1255
          %1272 = vst [vmem:[#allocation2 + $0x20] sm:$0xff] %v1256
          %1273 = vst [vmem:[#allocation2 + $0x28] sm:$0xff] %v1257
          %1274 = vst [vmem:[#allocation2 + $0x30] sm:$0xff] %v1258
          %1275 = vst [vmem:[#allocation2 + $0x38] sm:$0xff] %v1259
          %1276 = vst [vmem:[#allocation2 + $0x40] sm:$0xff] %v1260
          %1277 = vst [vmem:[#allocation2 + $0x48] sm:$0xff] %v1261
          %1278 = vst [vmem:[#allocation2 + $0x50] sm:$0xff] %v1262
          %1279 = vst [vmem:[#allocation2 + $0x58] sm:$0xff] %v1263
          %1280 = vst [vmem:[#allocation2 + $0x60] sm:$0xff] %v1264
          %1281 = vst [vmem:[#allocation2 + $0x68] sm:$0xff] %v1265
          %1282 = vst [vmem:[#allocation2 + $0x70] sm:$0xff] %v1266
          %1283 = vst [vmem:[#allocation2 + $0x78] sm:$0xff] %v1267
          %v1284 = vpack.c.bf16 %v939, %v935
          %v1285 = vpack.c.bf16 %v949, %v945
          %v1286 = vpack.c.bf16 %v959, %v955
          %v1287 = vpack.c.bf16 %v969, %v965
          %v1288 = vpack.c.bf16 %v979, %v975
          %v1289 = vpack.c.bf16 %v989, %v985
          %v1290 = vpack.c.bf16 %v999, %v995
          %v1291 = vpack.c.bf16 %v1009, %v1005
          %v1292 = vpack.c.bf16 %v1019, %v1015
          %v1293 = vpack.c.bf16 %v1029, %v1025
          %v1294 = vpack.c.bf16 %v1039, %v1035
          %v1295 = vpack.c.bf16 %v1049, %v1045
          %v1296 = vpack.c.bf16 %v1059, %v1055
          %v1297 = vpack.c.bf16 %v1069, %v1065
          %v1298 = vpack.c.bf16 %v1079, %v1075
          %v1299 = vpack.c.bf16 %v1089, %v1085
          %1300 = vst [vmem:[#allocation3] sm:$0xff] %v1284
          %1301 = vst [vmem:[#allocation3 + $0x8] sm:$0xff] %v1285
          %1302 = vst [vmem:[#allocation3 + $0x10] sm:$0xff] %v1286
          %1303 = vst [vmem:[#allocation3 + $0x18] sm:$0xff] %v1287
          %1304 = vst [vmem:[#allocation3 + $0x20] sm:$0xff] %v1288
          %1305 = vst [vmem:[#allocation3 + $0x28] sm:$0xff] %v1289
          %1306 = vst [vmem:[#allocation3 + $0x30] sm:$0xff] %v1290
          %1307 = vst [vmem:[#allocation3 + $0x38] sm:$0xff] %v1291
          %1308 = vst [vmem:[#allocation3 + $0x40] sm:$0xff] %v1292
          %1309 = vst [vmem:[#allocation3 + $0x48] sm:$0xff] %v1293
          %1310 = vst [vmem:[#allocation3 + $0x50] sm:$0xff] %v1294
          %1311 = vst [vmem:[#allocation3 + $0x58] sm:$0xff] %v1295
          %1312 = vst [vmem:[#allocation3 + $0x60] sm:$0xff] %v1296
          %1313 = vst [vmem:[#allocation3 + $0x68] sm:$0xff] %v1297
          %1314 = vst [vmem:[#allocation3 + $0x70] sm:$0xff] %v1298
          %1315 = vst [vmem:[#allocation3 + $0x78] sm:$0xff] %v1299
          %v1316 = vpack.c.bf16 %v1129, %v1126
          %v1317 = vpack.c.bf16 %v1137, %v1134
          %v1318 = vpack.c.bf16 %v1145, %v1142
          %v1319 = vpack.c.bf16 %v1153, %v1150
          %v1320 = vpack.c.bf16 %v1161, %v1158
          %v1321 = vpack.c.bf16 %v1169, %v1166
          %v1322 = vpack.c.bf16 %v1177, %v1174
          %v1323 = vpack.c.bf16 %v1185, %v1182
          %v1324 = vpack.c.bf16 %v1193, %v1190
          %v1325 = vpack.c.bf16 %v1201, %v1198
          %v1326 = vpack.c.bf16 %v1209, %v1206
          %v1327 = vpack.c.bf16 %v1217, %v1214
          %v1328 = vpack.c.bf16 %v1225, %v1222
          %v1329 = vpack.c.bf16 %v1233, %v1230
          %v1330 = vpack.c.bf16 %v1241, %v1238
          %v1331 = vpack.c.bf16 %v1249, %v1246
          %1332 = vst [vmem:[#allocation4] sm:$0xff] %v1316
          %1333 = vst [vmem:[#allocation4 + $0x8] sm:$0xff] %v1317
          %1334 = vst [vmem:[#allocation4 + $0x10] sm:$0xff] %v1318
          %1335 = vst [vmem:[#allocation4 + $0x18] sm:$0xff] %v1319
          %1336 = vst [vmem:[#allocation4 + $0x20] sm:$0xff] %v1320
          %1337 = vst [vmem:[#allocation4 + $0x28] sm:$0xff] %v1321
          %1338 = vst [vmem:[#allocation4 + $0x30] sm:$0xff] %v1322
          %1339 = vst [vmem:[#allocation4 + $0x38] sm:$0xff] %v1323
          %1340 = vst [vmem:[#allocation4 + $0x40] sm:$0xff] %v1324
          %1341 = vst [vmem:[#allocation4 + $0x48] sm:$0xff] %v1325
          %1342 = vst [vmem:[#allocation4 + $0x50] sm:$0xff] %v1326
          %1343 = vst [vmem:[#allocation4 + $0x58] sm:$0xff] %v1327
          %1344 = vst [vmem:[#allocation4 + $0x60] sm:$0xff] %v1328
          %1345 = vst [vmem:[#allocation4 + $0x68] sm:$0xff] %v1329
          %1346 = vst [vmem:[#allocation4 + $0x70] sm:$0xff] %v1330
          %1347 = vst [vmem:[#allocation4 + $0x78] sm:$0xff] %v1331
        $region56: #{tpu_custom_call.1} parent=35 // pred_fallthru
          _
        %s1348 = smul.u32 %s31, 128
        %s1349 = sshra.s32 %s1348, 4
        %s1350 = sand.u32 %s1348, 15
        %s1351 = smul.addr %s1349, 8
        %s1352 = scalar_lea.vmem [#allocation2], %s1351
        %v1353 = vld [vmem:[%s1352] sm:$0xff]
        %v1354 = vld [vmem:[%s1352 + $0x8] sm:$0xff]
        %v1355 = vld [vmem:[%s1352 + $0x10] sm:$0xff]
        %v1356 = vld [vmem:[%s1352 + $0x18] sm:$0xff]
        %v1357 = vld [vmem:[%s1352 + $0x20] sm:$0xff]
        %v1358 = vld [vmem:[%s1352 + $0x28] sm:$0xff]
        %v1359 = vld [vmem:[%s1352 + $0x30] sm:$0xff]
        %v1360 = vld [vmem:[%s1352 + $0x38] sm:$0xff]
        %v1361 = vld [vmem:[#allocation3] sm:$0xff]
        %v1362 = vld [vmem:[#allocation3 + $0x8] sm:$0xff]
        %v1363 = vld [vmem:[#allocation3 + $0x10] sm:$0xff]
        %v1364 = vld [vmem:[#allocation3 + $0x18] sm:$0xff]
        %v1365 = vld [vmem:[#allocation3 + $0x20] sm:$0xff]
        %v1366 = vld [vmem:[#allocation3 + $0x28] sm:$0xff]
        %v1367 = vld [vmem:[#allocation3 + $0x30] sm:$0xff]
        %v1368 = vld [vmem:[#allocation3 + $0x38] sm:$0xff]
        %v1369 = vld [vmem:[#allocation3 + $0x40] sm:$0xff]
        %v1370 = vld [vmem:[#allocation3 + $0x48] sm:$0xff]
        %v1371 = vld [vmem:[#allocation3 + $0x50] sm:$0xff]
        %v1372 = vld [vmem:[#allocation3 + $0x58] sm:$0xff]
        %v1373 = vld [vmem:[#allocation3 + $0x60] sm:$0xff]
        %v1374 = vld [vmem:[#allocation3 + $0x68] sm:$0xff]
        %v1375 = vld [vmem:[#allocation3 + $0x70] sm:$0xff]
        %v1376 = vld [vmem:[#allocation3 + $0x78] sm:$0xff]
        %1377 = vmatprep.subr.bf16.mxu0 0
        %1378 = vmatpush1.bf16.xpose.msra.mxu0 %v1361
        %1379 = vmatprep.subr.bf16.mxu0 0
        %1380 = vmatpush1.bf16.xpose.msra.mxu0 %v1362
        %1381 = vmatprep.subr.bf16.mxu0 0
        %1382 = vmatpush1.bf16.xpose.msra.mxu0 %v1363
        %1383 = vmatprep.subr.bf16.mxu0 0
        %1384 = vmatpush1.bf16.xpose.msra.mxu0 %v1364
        %1385 = vmatprep.subr.bf16.mxu0 0
        %1386 = vmatpush1.bf16.xpose.msra.mxu0 %v1365
        %1387 = vmatprep.subr.bf16.mxu0 0
        %1388 = vmatpush1.bf16.xpose.msra.mxu0 %v1366
        %1389 = vmatprep.subr.bf16.mxu0 0
        %1390 = vmatpush1.bf16.xpose.msra.mxu0 %v1367
        %1391 = vmatprep.subr.bf16.mxu0 0
        %1392 = vmatpush1.bf16.xpose.msra.mxu0 %v1368
        %1393 = vmatprep.subr.bf16.mxu0 0
        %1394 = vmatpush1.bf16.xpose.msra.mxu0 %v1369
        %1395 = vmatprep.subr.bf16.mxu0 0
        %1396 = vmatpush1.bf16.xpose.msra.mxu0 %v1370
        %1397 = vmatprep.subr.bf16.mxu0 0
        %1398 = vmatpush1.bf16.xpose.msra.mxu0 %v1371
        %1399 = vmatprep.subr.bf16.mxu0 0
        %1400 = vmatpush1.bf16.xpose.msra.mxu0 %v1372
        %1401 = vmatprep.subr.bf16.mxu0 0
        %1402 = vmatpush1.bf16.xpose.msra.mxu0 %v1373
        %1403 = vmatprep.subr.bf16.mxu0 0
        %1404 = vmatpush1.bf16.xpose.msra.mxu0 %v1374
        %1405 = vmatprep.subr.bf16.mxu0 0
        %1406 = vmatpush1.bf16.xpose.msra.mxu0 %v1375
        %1407 = vmatprep.subr.bf16.mxu0 0
        %1408 = vmatpush1.bf16.xpose.msra.mxu0 %v1376
        %1409 = vmatprep.mubr.bf16.mxu0 0
        %1410 = vmatmul.mubr.bf16.gmra.mrb[0].mxu0 %v1353
        %v1411 = vpop.f32.mrb[0].mxu0
        %v1412 = vadd.f32 0.0, %v1411
        %v1413 = vpop.f32.mrb[0].mxu0
        %v1414 = vadd.f32 0.0, %v1413
        %v1415 = vpop.f32.mrb[0].mxu0
        %v1416 = vadd.f32 0.0, %v1415
        %v1417 = vpop.f32.mrb[0].mxu0
        %v1418 = vadd.f32 0.0, %v1417
        %1419 = vmatprep.mubr.bf16.mxu0 0
        %1420 = vmatmul.mubr.bf16.gmra.mrb[0].mxu0 %v1354
        %v1421 = vpop.f32.mrb[0].mxu0
        %v1422 = vadd.f32 0.0, %v1421
        %v1423 = vpop.f32.mrb[0].mxu0
        %v1424 = vadd.f32 0.0, %v1423
        %v1425 = vpop.f32.mrb[0].mxu0
        %v1426 = vadd.f32 0.0, %v1425
        %v1427 = vpop.f32.mrb[0].mxu0
        %v1428 = vadd.f32 0.0, %v1427
        %1429 = vmatprep.mubr.bf16.mxu0 0
        %1430 = vmatmul.mubr.bf16.gmra.mrb[0].mxu0 %v1355
        %v1431 = vpop.f32.mrb[0].mxu0
        %v1432 = vadd.f32 0.0, %v1431
        %v1433 = vpop.f32.mrb[0].mxu0
        %v1434 = vadd.f32 0.0, %v1433
        %v1435 = vpop.f32.mrb[0].mxu0
        %v1436 = vadd.f32 0.0, %v1435
        %v1437 = vpop.f32.mrb[0].mxu0
        %v1438 = vadd.f32 0.0, %v1437
        %1439 = vmatprep.mubr.bf16.mxu0 0
        %1440 = vmatmul.mubr.bf16.gmra.mrb[0].mxu0 %v1356
        %v1441 = vpop.f32.mrb[0].mxu0
        %v1442 = vadd.f32 0.0, %v1441
        %v1443 = vpop.f32.mrb[0].mxu0
        %v1444 = vadd.f32 0.0, %v1443
        %v1445 = vpop.f32.mrb[0].mxu0
        %v1446 = vadd.f32 0.0, %v1445
        %v1447 = vpop.f32.mrb[0].mxu0
        %v1448 = vadd.f32 0.0, %v1447
        %1449 = vmatprep.mubr.bf16.mxu0 0
        %1450 = vmatmul.mubr.bf16.gmra.mrb[0].mxu0 %v1357
        %v1451 = vpop.f32.mrb[0].mxu0
        %v1452 = vadd.f32 0.0, %v1451
        %v1453 = vpop.f32.mrb[0].mxu0
        %v1454 = vadd.f32 0.0, %v1453
        %v1455 = vpop.f32.mrb[0].mxu0
        %v1456 = vadd.f32 0.0, %v1455
        %v1457 = vpop.f32.mrb[0].mxu0
        %v1458 = vadd.f32 0.0, %v1457
        %1459 = vmatprep.mubr.bf16.mxu0 0
        %1460 = vmatmul.mubr.bf16.gmra.mrb[0].mxu0 %v1358
        %v1461 = vpop.f32.mrb[0].mxu0
        %v1462 = vadd.f32 0.0, %v1461
        %v1463 = vpop.f32.mrb[0].mxu0
        %v1464 = vadd.f32 0.0, %v1463
        %v1465 = vpop.f32.mrb[0].mxu0
        %v1466 = vadd.f32 0.0, %v1465
        %v1467 = vpop.f32.mrb[0].mxu0
        %v1468 = vadd.f32 0.0, %v1467
        %1469 = vmatprep.mubr.bf16.mxu0 0
        %1470 = vmatmul.mubr.bf16.gmra.mrb[0].mxu0 %v1359
        %v1471 = vpop.f32.mrb[0].mxu0
        %v1472 = vadd.f32 0.0, %v1471
        %v1473 = vpop.f32.mrb[0].mxu0
        %v1474 = vadd.f32 0.0, %v1473
        %v1475 = vpop.f32.mrb[0].mxu0
        %v1476 = vadd.f32 0.0, %v1475
        %v1477 = vpop.f32.mrb[0].mxu0
        %v1478 = vadd.f32 0.0, %v1477
        %1479 = vmatprep.mubr.bf16.mxu0 0
        %1480 = vmatmul.mubr.bf16.gmra.mrb[0].mxu0 %v1360
        %v1481 = vpop.f32.mrb[0].mxu0
        %v1482 = vadd.f32 0.0, %v1481
        %v1483 = vpop.f32.mrb[0].mxu0
        %v1484 = vadd.f32 0.0, %v1483
        %v1485 = vpop.f32.mrb[0].mxu0
        %v1486 = vadd.f32 0.0, %v1485
        %v1487 = vpop.f32.mrb[0].mxu0
        %v1488 = vadd.f32 0.0, %v1487
        %1489 = vdwg.mxu0
        %v1490 = vmax.f32 %v1412, %v1414
        %1491 = vmax.xlane.f32.xlu0 %v1490
        %v1492 = vpop.xlane.xlu0 %1491
        %v1493 = vmax.f32 %v1416, %v1418
        %1494 = vmax.xlane.f32.xlu0 %v1493
        %v1495 = vpop.xlane.xlu0 %1494
        %v1496 = vmax.f32 %v1422, %v1424
        %1497 = vmax.xlane.f32.xlu0 %v1496
        %v1498 = vpop.xlane.xlu0 %1497
        %v1499 = vmax.f32 %v1426, %v1428
        %1500 = vmax.xlane.f32.xlu0 %v1499
        %v1501 = vpop.xlane.xlu0 %1500
        %v1502 = vmax.f32 %v1432, %v1434
        %1503 = vmax.xlane.f32.xlu0 %v1502
        %v1504 = vpop.xlane.xlu0 %1503
        %v1505 = vmax.f32 %v1436, %v1438
        %1506 = vmax.xlane.f32.xlu0 %v1505
        %v1507 = vpop.xlane.xlu0 %1506
        %v1508 = vmax.f32 %v1442, %v1444
        %1509 = vmax.xlane.f32.xlu0 %v1508
        %v1510 = vpop.xlane.xlu0 %1509
        %v1511 = vmax.f32 %v1446, %v1448
        %1512 = vmax.xlane.f32.xlu0 %v1511
        %v1513 = vpop.xlane.xlu0 %1512
        %v1514 = vmax.f32 %v1452, %v1454
        %1515 = vmax.xlane.f32.xlu0 %v1514
        %v1516 = vpop.xlane.xlu0 %1515
        %v1517 = vmax.f32 %v1456, %v1458
        %1518 = vmax.xlane.f32.xlu0 %v1517
        %v1519 = vpop.xlane.xlu0 %1518
        %v1520 = vmax.f32 %v1462, %v1464
        %1521 = vmax.xlane.f32.xlu0 %v1520
        %v1522 = vpop.xlane.xlu0 %1521
        %v1523 = vmax.f32 %v1466, %v1468
        %1524 = vmax.xlane.f32.xlu0 %v1523
        %v1525 = vpop.xlane.xlu0 %1524
        %v1526 = vmax.f32 %v1472, %v1474
        %1527 = vmax.xlane.f32.xlu0 %v1526
        %v1528 = vpop.xlane.xlu0 %1527
        %v1529 = vmax.f32 %v1476, %v1478
        %1530 = vmax.xlane.f32.xlu0 %v1529
        %v1531 = vpop.xlane.xlu0 %1530
        %v1532 = vmax.f32 %v1482, %v1484
        %1533 = vmax.xlane.f32.xlu0 %v1532
        %v1534 = vpop.xlane.xlu0 %1533
        %v1535 = vmax.f32 %v1486, %v1488
        %1536 = vmax.xlane.f32.xlu0 %v1535
        %v1537 = vpop.xlane.xlu0 %1536
        %v1538 = vsub.f32 %v1412, %v1492
        %v1539 = vsub.f32 %v1414, %v1492
        %v1540 = vsub.f32 %v1416, %v1495
        %v1541 = vsub.f32 %v1418, %v1495
        %v1542 = vsub.f32 %v1422, %v1498
        %v1543 = vsub.f32 %v1424, %v1498
        %v1544 = vsub.f32 %v1426, %v1501
        %v1545 = vsub.f32 %v1428, %v1501
        %v1546 = vsub.f32 %v1432, %v1504
        %v1547 = vsub.f32 %v1434, %v1504
        %v1548 = vsub.f32 %v1436, %v1507
        %v1549 = vsub.f32 %v1438, %v1507
        %v1550 = vsub.f32 %v1442, %v1510
        %v1551 = vsub.f32 %v1444, %v1510
        %v1552 = vsub.f32 %v1446, %v1513
        %v1553 = vsub.f32 %v1448, %v1513
        %v1554 = vsub.f32 %v1452, %v1516
        %v1555 = vsub.f32 %v1454, %v1516
        %v1556 = vsub.f32 %v1456, %v1519
        %v1557 = vsub.f32 %v1458, %v1519
        %v1558 = vsub.f32 %v1462, %v1522
        %v1559 = vsub.f32 %v1464, %v1522
        %v1560 = vsub.f32 %v1466, %v1525
        %v1561 = vsub.f32 %v1468, %v1525
        %v1562 = vsub.f32 %v1472, %v1528
        %v1563 = vsub.f32 %v1474, %v1528
        %v1564 = vsub.f32 %v1476, %v1531
        %v1565 = vsub.f32 %v1478, %v1531
        %v1566 = vsub.f32 %v1482, %v1534
        %v1567 = vsub.f32 %v1484, %v1534
        %v1568 = vsub.f32 %v1486, %v1537
        %v1569 = vsub.f32 %v1488, %v1537
        %v1570 = vpack.c.bf16 %v1540, %v1538
        %v1571 = vpack.c.bf16 %v1541, %v1539
        %v1572 = vpack.c.bf16 %v1544, %v1542
        %v1573 = vpack.c.bf16 %v1545, %v1543
        %v1574 = vpack.c.bf16 %v1548, %v1546
        %v1575 = vpack.c.bf16 %v1549, %v1547
        %v1576 = vpack.c.bf16 %v1552, %v1550
        %v1577 = vpack.c.bf16 %v1553, %v1551
        %v1578 = vpack.c.bf16 %v1556, %v1554
        %v1579 = vpack.c.bf16 %v1557, %v1555
        %v1580 = vpack.c.bf16 %v1560, %v1558
        %v1581 = vpack.c.bf16 %v1561, %v1559
        %v1582 = vpack.c.bf16 %v1564, %v1562
        %v1583 = vpack.c.bf16 %v1565, %v1563
        %v1584 = vpack.c.bf16 %v1568, %v1566
        %v1585 = vpack.c.bf16 %v1569, %v1567
        %v1587 = vmul.bf16 %v1570, 1069105081
        %v1588 = vpow.bf16.pop %v1587
        %v1590 = vmul.bf16 %v1571, 1069105081
        %v1591 = vpow.bf16.pop %v1590
        %v1593 = vmul.bf16 %v1572, 1069105081
        %v1594 = vpow.bf16.pop %v1593
        %v1596 = vmul.bf16 %v1573, 1069105081
        %v1597 = vpow.bf16.pop %v1596
        %v1599 = vmul.bf16 %v1574, 1069105081
        %v1600 = vpow.bf16.pop %v1599
        %v1602 = vmul.bf16 %v1575, 1069105081
        %v1603 = vpow.bf16.pop %v1602
        %v1605 = vmul.bf16 %v1576, 1069105081
        %v1606 = vpow.bf16.pop %v1605
        %v1608 = vmul.bf16 %v1577, 1069105081
        %v1609 = vpow.bf16.pop %v1608
        %v1611 = vmul.bf16 %v1578, 1069105081
        %v1612 = vpow.bf16.pop %v1611
        %v1614 = vmul.bf16 %v1579, 1069105081
        %v1615 = vpow.bf16.pop %v1614
        %v1617 = vmul.bf16 %v1580, 1069105081
        %v1618 = vpow.bf16.pop %v1617
        %v1620 = vmul.bf16 %v1581, 1069105081
        %v1621 = vpow.bf16.pop %v1620
        %v1623 = vmul.bf16 %v1582, 1069105081
        %v1624 = vpow.bf16.pop %v1623
        %v1626 = vmul.bf16 %v1583, 1069105081
        %v1627 = vpow.bf16.pop %v1626
        %v1629 = vmul.bf16 %v1584, 1069105081
        %v1630 = vpow.bf16.pop %v1629
        %v1632 = vmul.bf16 %v1585, 1069105081
        %v1633 = vpow.bf16.pop %v1632
        %v1634 = vunpack.c.l.bf16 %v1588
        %v1635 = vunpack.c.l.bf16 %v1591
        %v1636 = vunpack.c.h.bf16 %v1588
        %v1637 = vunpack.c.h.bf16 %v1591
        %v1638 = vunpack.c.l.bf16 %v1594
        %v1639 = vunpack.c.l.bf16 %v1597
        %v1640 = vunpack.c.h.bf16 %v1594
        %v1641 = vunpack.c.h.bf16 %v1597
        %v1642 = vunpack.c.l.bf16 %v1600
        %v1643 = vunpack.c.l.bf16 %v1603
        %v1644 = vunpack.c.h.bf16 %v1600
        %v1645 = vunpack.c.h.bf16 %v1603
        %v1646 = vunpack.c.l.bf16 %v1606
        %v1647 = vunpack.c.l.bf16 %v1609
        %v1648 = vunpack.c.h.bf16 %v1606
        %v1649 = vunpack.c.h.bf16 %v1609
        %v1650 = vunpack.c.l.bf16 %v1612
        %v1651 = vunpack.c.l.bf16 %v1615
        %v1652 = vunpack.c.h.bf16 %v1612
        %v1653 = vunpack.c.h.bf16 %v1615
        %v1654 = vunpack.c.l.bf16 %v1618
        %v1655 = vunpack.c.l.bf16 %v1621
        %v1656 = vunpack.c.h.bf16 %v1618
        %v1657 = vunpack.c.h.bf16 %v1621
        %v1658 = vunpack.c.l.bf16 %v1624
        %v1659 = vunpack.c.l.bf16 %v1627
        %v1660 = vunpack.c.h.bf16 %v1624
        %v1661 = vunpack.c.h.bf16 %v1627
        %v1662 = vunpack.c.l.bf16 %v1630
        %v1663 = vunpack.c.l.bf16 %v1633
        %v1664 = vunpack.c.h.bf16 %v1630
        %v1665 = vunpack.c.h.bf16 %v1633
        %v1666 = vadd.f32 %v1634, %v1635
        %1667 = vadd.xlane.f32.xlu0 %v1666
        %v1668 = vpop.xlane.xlu0 %1667
        %v1669 = vadd.f32 %v1636, %v1637
        %1670 = vadd.xlane.f32.xlu0 %v1669
        %v1671 = vpop.xlane.xlu0 %1670
        %v1672 = vadd.f32 %v1638, %v1639
        %1673 = vadd.xlane.f32.xlu0 %v1672
        %v1674 = vpop.xlane.xlu0 %1673
        %v1675 = vadd.f32 %v1640, %v1641
        %1676 = vadd.xlane.f32.xlu0 %v1675
        %v1677 = vpop.xlane.xlu0 %1676
        %v1678 = vadd.f32 %v1642, %v1643
        %1679 = vadd.xlane.f32.xlu0 %v1678
        %v1680 = vpop.xlane.xlu0 %1679
        %v1681 = vadd.f32 %v1644, %v1645
        %1682 = vadd.xlane.f32.xlu0 %v1681
        %v1683 = vpop.xlane.xlu0 %1682
        %v1684 = vadd.f32 %v1646, %v1647
        %1685 = vadd.xlane.f32.xlu0 %v1684
        %v1686 = vpop.xlane.xlu0 %1685
        %v1687 = vadd.f32 %v1648, %v1649
        %1688 = vadd.xlane.f32.xlu0 %v1687
        %v1689 = vpop.xlane.xlu0 %1688
        %v1690 = vadd.f32 %v1650, %v1651
        %1691 = vadd.xlane.f32.xlu0 %v1690
        %v1692 = vpop.xlane.xlu0 %1691
        %v1693 = vadd.f32 %v1652, %v1653
        %1694 = vadd.xlane.f32.xlu0 %v1693
        %v1695 = vpop.xlane.xlu0 %1694
        %v1696 = vadd.f32 %v1654, %v1655
        %1697 = vadd.xlane.f32.xlu0 %v1696
        %v1698 = vpop.xlane.xlu0 %1697
        %v1699 = vadd.f32 %v1656, %v1657
        %1700 = vadd.xlane.f32.xlu0 %v1699
        %v1701 = vpop.xlane.xlu0 %1700
        %v1702 = vadd.f32 %v1658, %v1659
        %1703 = vadd.xlane.f32.xlu0 %v1702
        %v1704 = vpop.xlane.xlu0 %1703
        %v1705 = vadd.f32 %v1660, %v1661
        %1706 = vadd.xlane.f32.xlu0 %v1705
        %v1707 = vpop.xlane.xlu0 %1706
        %v1708 = vadd.f32 %v1662, %v1663
        %1709 = vadd.xlane.f32.xlu0 %v1708
        %v1710 = vpop.xlane.xlu0 %1709
        %v1711 = vadd.f32 %v1664, %v1665
        %1712 = vadd.xlane.f32.xlu0 %v1711
        %v1713 = vpop.xlane.xlu0 %1712
        %v1714 = vld [vmem:[#allocation4] sm:$0xff]
        %v1715 = vld [vmem:[#allocation4 + $0x8] sm:$0xff]
        %v1716 = vld [vmem:[#allocation4 + $0x10] sm:$0xff]
        %v1717 = vld [vmem:[#allocation4 + $0x18] sm:$0xff]
        %v1718 = vld [vmem:[#allocation4 + $0x20] sm:$0xff]
        %v1719 = vld [vmem:[#allocation4 + $0x28] sm:$0xff]
        %v1720 = vld [vmem:[#allocation4 + $0x30] sm:$0xff]
        %v1721 = vld [vmem:[#allocation4 + $0x38] sm:$0xff]
        %v1722 = vld [vmem:[#allocation4 + $0x40] sm:$0xff]
        %v1723 = vld [vmem:[#allocation4 + $0x48] sm:$0xff]
        %v1724 = vld [vmem:[#allocation4 + $0x50] sm:$0xff]
        %v1725 = vld [vmem:[#allocation4 + $0x58] sm:$0xff]
        %v1726 = vld [vmem:[#allocation4 + $0x60] sm:$0xff]
        %v1727 = vld [vmem:[#allocation4 + $0x68] sm:$0xff]
        %v1728 = vld [vmem:[#allocation4 + $0x70] sm:$0xff]
        %v1729 = vld [vmem:[#allocation4 + $0x78] sm:$0xff]
        %1730 = vmatprep.subr.bf16.mxu0 0
        %1731 = vmatpush1.bf16.msra.mxu0 %v1714
        %1732 = vmatprep.subr.bf16.mxu0 0
        %1733 = vmatpush1.bf16.msra.mxu0 %v1715
        %1734 = vmatprep.subr.bf16.mxu0 0
        %1735 = vmatpush1.bf16.msra.mxu0 %v1716
        %1736 = vmatprep.subr.bf16.mxu0 0
        %1737 = vmatpush1.bf16.msra.mxu0 %v1717
        %1738 = vmatprep.subr.bf16.mxu0 0
        %1739 = vmatpush1.bf16.msra.mxu0 %v1718
        %1740 = vmatprep.subr.bf16.mxu0 0
        %1741 = vmatpush1.bf16.msra.mxu0 %v1719
        %1742 = vmatprep.subr.bf16.mxu0 0
        %1743 = vmatpush1.bf16.msra.mxu0 %v1720
        %1744 = vmatprep.subr.bf16.mxu0 0
        %1745 = vmatpush1.bf16.msra.mxu0 %v1721
        %1746 = vmatprep.subr.bf16.mxu0 0
        %1747 = vmatpush1.bf16.msra.mxu0 %v1722
        %1748 = vmatprep.subr.bf16.mxu0 0
        %1749 = vmatpush1.bf16.msra.mxu0 %v1723
        %1750 = vmatprep.subr.bf16.mxu0 0
        %1751 = vmatpush1.bf16.msra.mxu0 %v1724
        %1752 = vmatprep.subr.bf16.mxu0 0
        %1753 = vmatpush1.bf16.msra.mxu0 %v1725
        %1754 = vmatprep.subr.bf16.mxu0 0
        %1755 = vmatpush1.bf16.msra.mxu0 %v1726
        %1756 = vmatprep.subr.bf16.mxu0 0
        %1757 = vmatpush1.bf16.msra.mxu0 %v1727
        %1758 = vmatprep.subr.bf16.mxu0 0
        %1759 = vmatpush1.bf16.msra.mxu0 %v1728
        %1760 = vmatprep.subr.bf16.mxu0 0
        %1761 = vmatpush1.bf16.msra.mxu0 %v1729
        %1762 = vmatprep.mubr.bf16.mxu0 %v1591
        %1763 = vmatmul.mubr.bf16.gmra.mrb[0].mxu0 %v1588
        %v1764 = vpop.f32.mrb[0].mxu0
        %v1765 = vadd.f32 0.0, %v1764
        %v1766 = vpop.f32.mrb[0].mxu0
        %v1767 = vpop.f32.mrb[0].mxu0
        %v1768 = vadd.f32 0.0, %v1767
        %v1769 = vpop.f32.mrb[0].mxu0
        %1770 = vmatprep.mubr.bf16.mxu0 %v1597
        %1771 = vmatmul.mubr.bf16.gmra.mrb[0].mxu0 %v1594
        %v1772 = vpop.f32.mrb[0].mxu0
        %v1773 = vadd.f32 0.0, %v1772
        %v1774 = vpop.f32.mrb[0].mxu0
        %v1775 = vpop.f32.mrb[0].mxu0
        %v1776 = vadd.f32 0.0, %v1775
        %v1777 = vpop.f32.mrb[0].mxu0
        %1778 = vmatprep.mubr.bf16.mxu0 %v1603
        %1779 = vmatmul.mubr.bf16.gmra.mrb[0].mxu0 %v1600
        %v1780 = vpop.f32.mrb[0].mxu0
        %v1781 = vadd.f32 0.0, %v1780
        %v1782 = vpop.f32.mrb[0].mxu0
        %v1783 = vpop.f32.mrb[0].mxu0
        %v1784 = vadd.f32 0.0, %v1783
        %v1785 = vpop.f32.mrb[0].mxu0
        %1786 = vmatprep.mubr.bf16.mxu0 %v1609
        %1787 = vmatmul.mubr.bf16.gmra.mrb[0].mxu0 %v1606
        %v1788 = vpop.f32.mrb[0].mxu0
        %v1789 = vadd.f32 0.0, %v1788
        %v1790 = vpop.f32.mrb[0].mxu0
        %v1791 = vpop.f32.mrb[0].mxu0
        %v1792 = vadd.f32 0.0, %v1791
        %v1793 = vpop.f32.mrb[0].mxu0
        %1794 = vmatprep.mubr.bf16.mxu0 %v1615
        %1795 = vmatmul.mubr.bf16.gmra.mrb[0].mxu0 %v1612
        %v1796 = vpop.f32.mrb[0].mxu0
        %v1797 = vadd.f32 0.0, %v1796
        %v1798 = vpop.f32.mrb[0].mxu0
        %v1799 = vpop.f32.mrb[0].mxu0
        %v1800 = vadd.f32 0.0, %v1799
        %v1801 = vpop.f32.mrb[0].mxu0
        %1802 = vmatprep.mubr.bf16.mxu0 %v1621
        %1803 = vmatmul.mubr.bf16.gmra.mrb[0].mxu0 %v1618
        %v1804 = vpop.f32.mrb[0].mxu0
        %v1805 = vadd.f32 0.0, %v1804
        %v1806 = vpop.f32.mrb[0].mxu0
        %v1807 = vpop.f32.mrb[0].mxu0
        %v1808 = vadd.f32 0.0, %v1807
        %v1809 = vpop.f32.mrb[0].mxu0
        %1810 = vmatprep.mubr.bf16.mxu0 %v1627
        %1811 = vmatmul.mubr.bf16.gmra.mrb[0].mxu0 %v1624
        %v1812 = vpop.f32.mrb[0].mxu0
        %v1813 = vadd.f32 0.0, %v1812
        %v1814 = vpop.f32.mrb[0].mxu0
        %v1815 = vpop.f32.mrb[0].mxu0
        %v1816 = vadd.f32 0.0, %v1815
        %v1817 = vpop.f32.mrb[0].mxu0
        %1818 = vmatprep.mubr.bf16.mxu0 %v1633
        %1819 = vmatmul.mubr.bf16.gmra.mrb[0].mxu0 %v1630
        %v1820 = vpop.f32.mrb[0].mxu0
        %v1821 = vadd.f32 0.0, %v1820
        %v1822 = vpop.f32.mrb[0].mxu0
        %v1823 = vpop.f32.mrb[0].mxu0
        %v1824 = vadd.f32 0.0, %v1823
        %v1825 = vpop.f32.mrb[0].mxu0
        %1826 = vdwg.mxu0
        %v1827 = vrcp.pop %v1668
        %v1828 = vrcp.pop %v1671
        %v1829 = vrcp.pop %v1674
        %v1830 = vrcp.pop %v1677
        %v1831 = vrcp.pop %v1680
        %v1832 = vrcp.pop %v1683
        %v1833 = vrcp.pop %v1686
        %v1834 = vrcp.pop %v1689
        %v1835 = vrcp.pop %v1692
        %v1836 = vrcp.pop %v1695
        %v1837 = vrcp.pop %v1698
        %v1838 = vrcp.pop %v1701
        %v1839 = vrcp.pop %v1704
        %v1840 = vrcp.pop %v1707
        %v1841 = vrcp.pop %v1710
        %v1842 = vrcp.pop %v1713
        %v1843 = vmul.f32 %v1765, %v1827
        %v1844 = vmul.f32 %v1768, %v1828
        %v1845 = vmul.f32 %v1773, %v1829
        %v1846 = vmul.f32 %v1776, %v1830
        %v1847 = vmul.f32 %v1781, %v1831
        %v1848 = vmul.f32 %v1784, %v1832
        %v1849 = vmul.f32 %v1789, %v1833
        %v1850 = vmul.f32 %v1792, %v1834
        %v1851 = vmul.f32 %v1797, %v1835
        %v1852 = vmul.f32 %v1800, %v1836
        %v1853 = vmul.f32 %v1805, %v1837
        %v1854 = vmul.f32 %v1808, %v1838
        %v1855 = vmul.f32 %v1813, %v1839
        %v1856 = vmul.f32 %v1816, %v1840
        %v1857 = vmul.f32 %v1821, %v1841
        %v1858 = vmul.f32 %v1824, %v1842
        %s1859 = sshra.s32 %s1348, 3
        %s1860 = sand.u32 %s1348, 7
        %s1861 = smul.u32 %s1859, 2
        %s1862 = smul.addr %s1861, 8
        %s1863 = scalar_lea.vmem [#allocation5], %s1862
        %v1864 = vld [vmem:[%s1863] sm:$0xff]
        %v1865 = vld [vmem:[%s1863 + $0x8] sm:$0xff]
        %v1866 = vld [vmem:[%s1863 + $0x10] sm:$0xff]
        %v1867 = vld [vmem:[%s1863 + $0x18] sm:$0xff]
        %v1868 = vld [vmem:[%s1863 + $0x20] sm:$0xff]
        %v1869 = vld [vmem:[%s1863 + $0x28] sm:$0xff]
        %v1870 = vld [vmem:[%s1863 + $0x30] sm:$0xff]
        %v1871 = vld [vmem:[%s1863 + $0x38] sm:$0xff]
        %v1872 = vld [vmem:[%s1863 + $0x40] sm:$0xff]
        %v1873 = vld [vmem:[%s1863 + $0x48] sm:$0xff]
        %v1874 = vld [vmem:[%s1863 + $0x50] sm:$0xff]
        %v1875 = vld [vmem:[%s1863 + $0x58] sm:$0xff]
        %v1876 = vld [vmem:[%s1863 + $0x60] sm:$0xff]
        %v1877 = vld [vmem:[%s1863 + $0x68] sm:$0xff]
        %v1878 = vld [vmem:[%s1863 + $0x70] sm:$0xff]
        %v1879 = vld [vmem:[%s1863 + $0x78] sm:$0xff]
        %v1880 = vld [vmem:[%s1863 + $0x80] sm:$0xff]
        %v1881 = vld [vmem:[%s1863 + $0x88] sm:$0xff]
        %v1882 = vld [vmem:[%s1863 + $0x90] sm:$0xff]
        %v1883 = vld [vmem:[%s1863 + $0x98] sm:$0xff]
        %v1884 = vld [vmem:[%s1863 + $0xa0] sm:$0xff]
        %v1885 = vld [vmem:[%s1863 + $0xa8] sm:$0xff]
        %v1886 = vld [vmem:[%s1863 + $0xb0] sm:$0xff]
        %v1887 = vld [vmem:[%s1863 + $0xb8] sm:$0xff]
        %v1888 = vld [vmem:[%s1863 + $0xc0] sm:$0xff]
        %v1889 = vld [vmem:[%s1863 + $0xc8] sm:$0xff]
        %v1890 = vld [vmem:[%s1863 + $0xd0] sm:$0xff]
        %v1891 = vld [vmem:[%s1863 + $0xd8] sm:$0xff]
        %v1892 = vld [vmem:[%s1863 + $0xe0] sm:$0xff]
        %v1893 = vld [vmem:[%s1863 + $0xe8] sm:$0xff]
        %v1894 = vld [vmem:[%s1863 + $0xf0] sm:$0xff]
        %v1895 = vld [vmem:[%s1863 + $0xf8] sm:$0xff]
        %v1896 = vpack.c.bf16 %v1844, %v1843
        %v1897 = vpack.c.bf16 %v1846, %v1845
        %v1898 = vpack.c.bf16 %v1848, %v1847
        %v1899 = vpack.c.bf16 %v1850, %v1849
        %v1900 = vpack.c.bf16 %v1852, %v1851
        %v1901 = vpack.c.bf16 %v1854, %v1853
        %v1902 = vpack.c.bf16 %v1856, %v1855
        %v1903 = vpack.c.bf16 %v1858, %v1857
        %v1904 = vld [vmem:[%s277] sm:$0xff]
        %v1905 = vld [vmem:[%s277 + $0x8] sm:$0xff]
        %v1906 = vld [vmem:[%s277 + $0x10] sm:$0xff]
        %v1907 = vld [vmem:[%s277 + $0x18] sm:$0xff]
        %v1908 = vld [vmem:[%s277 + $0x20] sm:$0xff]
        %v1909 = vld [vmem:[%s277 + $0x28] sm:$0xff]
        %v1910 = vld [vmem:[%s277 + $0x30] sm:$0xff]
        %v1911 = vld [vmem:[%s277 + $0x38] sm:$0xff]
        %v1912 = vld [vmem:[%s277 + $0x40] sm:$0xff]
        %v1913 = vld [vmem:[%s277 + $0x48] sm:$0xff]
        %v1914 = vld [vmem:[%s277 + $0x50] sm:$0xff]
        %v1915 = vld [vmem:[%s277 + $0x58] sm:$0xff]
        %v1916 = vld [vmem:[%s277 + $0x60] sm:$0xff]
        %v1917 = vld [vmem:[%s277 + $0x68] sm:$0xff]
        %v1918 = vld [vmem:[%s277 + $0x70] sm:$0xff]
        %v1919 = vld [vmem:[%s277 + $0x78] sm:$0xff]
        %v1936 = vunpack.c.l.b16 %v1904
        %v1937 = vunpack.c.h.b16 %v1904
        %v1938 = vunpack.c.l.b16 %v1905
        %v1939 = vunpack.c.h.b16 %v1905
        %v1940 = vunpack.c.l.b16 %v1906
        %v1941 = vunpack.c.h.b16 %v1906
        %v1942 = vunpack.c.l.b16 %v1907
        %v1943 = vunpack.c.h.b16 %v1907
        %v1944 = vunpack.c.l.b16 %v1908
        %v1945 = vunpack.c.h.b16 %v1908
        %v1946 = vunpack.c.l.b16 %v1909
        %v1947 = vunpack.c.h.b16 %v1909
        %v1948 = vunpack.c.l.b16 %v1910
        %v1949 = vunpack.c.h.b16 %v1910
        %v1950 = vunpack.c.l.b16 %v1911
        %v1951 = vunpack.c.h.b16 %v1911
        %v1952 = vunpack.c.l.b16 %v1912
        %v1953 = vunpack.c.h.b16 %v1912
        %v1954 = vunpack.c.l.b16 %v1913
        %v1955 = vunpack.c.h.b16 %v1913
        %v1956 = vunpack.c.l.b16 %v1914
        %v1957 = vunpack.c.h.b16 %v1914
        %v1958 = vunpack.c.l.b16 %v1915
        %v1959 = vunpack.c.h.b16 %v1915
        %v1960 = vunpack.c.l.b16 %v1916
        %v1961 = vunpack.c.h.b16 %v1916
        %v1962 = vunpack.c.l.b16 %v1917
        %v1963 = vunpack.c.h.b16 %v1917
        %v1964 = vunpack.c.l.b16 %v1918
        %v1965 = vunpack.c.h.b16 %v1918
        %v1966 = vunpack.c.l.b16 %v1919
        %v1967 = vunpack.c.h.b16 %v1919
        %v1968 = vpack.c.b16 %v1938, %v1936
        %v1969 = vpack.c.b16 %v1939, %v1937
        %v1970 = vpack.c.b16 %v1942, %v1940
        %v1971 = vpack.c.b16 %v1943, %v1941
        %v1972 = vpack.c.b16 %v1946, %v1944
        %v1973 = vpack.c.b16 %v1947, %v1945
        %v1974 = vpack.c.b16 %v1950, %v1948
        %v1975 = vpack.c.b16 %v1951, %v1949
        %v1976 = vpack.c.b16 %v1954, %v1952
        %v1977 = vpack.c.b16 %v1955, %v1953
        %v1978 = vpack.c.b16 %v1958, %v1956
        %v1979 = vpack.c.b16 %v1959, %v1957
        %v1980 = vpack.c.b16 %v1962, %v1960
        %v1981 = vpack.c.b16 %v1963, %v1961
        %v1982 = vpack.c.b16 %v1966, %v1964
        %v1983 = vpack.c.b16 %v1967, %v1965
        %2000 = vmatprep.subr.bf16.mxu0 %v1969
        %2001 = vmatpush1.bf16.msra.mxu0 %v1968
        %2002 = vmatprep.subr.bf16.mxu0 %v1971
        %2003 = vmatpush1.bf16.msra.mxu0 %v1970
        %2004 = vmatprep.subr.bf16.mxu0 %v1973
        %2005 = vmatpush1.bf16.msra.mxu0 %v1972
        %2006 = vmatprep.subr.bf16.mxu0 %v1975
        %2007 = vmatpush1.bf16.msra.mxu0 %v1974
        %2008 = vmatprep.subr.bf16.mxu0 %v1977
        %2009 = vmatpush1.bf16.msra.mxu0 %v1976
        %2010 = vmatprep.subr.bf16.mxu0 %v1979
        %2011 = vmatpush1.bf16.msra.mxu0 %v1978
        %2012 = vmatprep.subr.bf16.mxu0 %v1981
        %2013 = vmatpush1.bf16.msra.mxu0 %v1980
        %2014 = vmatprep.subr.bf16.mxu0 %v1983
        %2015 = vmatpush1.bf16.msra.mxu0 %v1982
        %2016 = vmatprep.subr.bf16.mxu0 0
        %2017 = vmatpush1.bf16.msra.mxu0 0
        %2018 = vmatprep.subr.bf16.mxu0 0
        %2019 = vmatpush1.bf16.msra.mxu0 0
        %2020 = vmatprep.subr.bf16.mxu0 0
        %2021 = vmatpush1.bf16.msra.mxu0 0
        %2022 = vmatprep.subr.bf16.mxu0 0
        %2023 = vmatpush1.bf16.msra.mxu0 0
        %2024 = vmatprep.subr.bf16.mxu0 0
        %2025 = vmatpush1.bf16.msra.mxu0 0
        %2026 = vmatprep.subr.bf16.mxu0 0
        %2027 = vmatpush1.bf16.msra.mxu0 0
        %2028 = vmatprep.subr.bf16.mxu0 0
        %2029 = vmatpush1.bf16.msra.mxu0 0
        %2030 = vmatprep.subr.bf16.mxu0 0
        %2031 = vmatpush1.bf16.msra.mxu0 0
        %2032 = vmatprep.mubr.bf16.mxu0 0
        %2033 = vmatmul.mubr.bf16.gmra.mrb[0].mxu0 %v1896
        %v2034 = vpop.f32.mrb[0].mxu0
        %v2035 = vadd.f32 0.0, %v2034
        %v2036 = vpop.f32.mrb[0].mxu0
        %v2037 = vadd.f32 0.0, %v2036
        %v2038 = vpop.f32.mrb[0].mxu0
        %v2039 = vadd.f32 0.0, %v2038
        %v2040 = vpop.f32.mrb[0].mxu0
        %v2041 = vadd.f32 0.0, %v2040
        %2042 = vmatprep.mubr.bf16.mxu0 0
        %2043 = vmatmul.mubr.bf16.gmra.mrb[0].mxu0 %v1897
        %v2044 = vpop.f32.mrb[0].mxu0
        %v2045 = vadd.f32 0.0, %v2044
        %v2046 = vpop.f32.mrb[0].mxu0
        %v2047 = vadd.f32 0.0, %v2046
        %v2048 = vpop.f32.mrb[0].mxu0
        %v2049 = vadd.f32 0.0, %v2048
        %v2050 = vpop.f32.mrb[0].mxu0
        %v2051 = vadd.f32 0.0, %v2050
        %2052 = vmatprep.mubr.bf16.mxu0 0
        %2053 = vmatmul.mubr.bf16.gmra.mrb[0].mxu0 %v1898
        %v2054 = vpop.f32.mrb[0].mxu0
        %v2055 = vadd.f32 0.0, %v2054
        %v2056 = vpop.f32.mrb[0].mxu0
        %v2057 = vadd.f32 0.0, %v2056
        %v2058 = vpop.f32.mrb[0].mxu0
        %v2059 = vadd.f32 0.0, %v2058
        %v2060 = vpop.f32.mrb[0].mxu0
        %v2061 = vadd.f32 0.0, %v2060
        %2062 = vmatprep.mubr.bf16.mxu0 0
        %2063 = vmatmul.mubr.bf16.gmra.mrb[0].mxu0 %v1899
        %v2064 = vpop.f32.mrb[0].mxu0
        %v2065 = vadd.f32 0.0, %v2064
        %v2066 = vpop.f32.mrb[0].mxu0
        %v2067 = vadd.f32 0.0, %v2066
        %v2068 = vpop.f32.mrb[0].mxu0
        %v2069 = vadd.f32 0.0, %v2068
        %v2070 = vpop.f32.mrb[0].mxu0
        %v2071 = vadd.f32 0.0, %v2070
        %2072 = vmatprep.mubr.bf16.mxu0 0
        %2073 = vmatmul.mubr.bf16.gmra.mrb[0].mxu0 %v1900
        %v2074 = vpop.f32.mrb[0].mxu0
        %v2075 = vadd.f32 0.0, %v2074
        %v2076 = vpop.f32.mrb[0].mxu0
        %v2077 = vadd.f32 0.0, %v2076
        %v2078 = vpop.f32.mrb[0].mxu0
        %v2079 = vadd.f32 0.0, %v2078
        %v2080 = vpop.f32.mrb[0].mxu0
        %v2081 = vadd.f32 0.0, %v2080
        %2082 = vmatprep.mubr.bf16.mxu0 0
        %2083 = vmatmul.mubr.bf16.gmra.mrb[0].mxu0 %v1901
        %v2084 = vpop.f32.mrb[0].mxu0
        %v2085 = vadd.f32 0.0, %v2084
        %v2086 = vpop.f32.mrb[0].mxu0
        %v2087 = vadd.f32 0.0, %v2086
        %v2088 = vpop.f32.mrb[0].mxu0
        %v2089 = vadd.f32 0.0, %v2088
        %v2090 = vpop.f32.mrb[0].mxu0
        %v2091 = vadd.f32 0.0, %v2090
        %2092 = vmatprep.mubr.bf16.mxu0 0
        %2093 = vmatmul.mubr.bf16.gmra.mrb[0].mxu0 %v1902
        %v2094 = vpop.f32.mrb[0].mxu0
        %v2095 = vadd.f32 0.0, %v2094
        %v2096 = vpop.f32.mrb[0].mxu0
        %v2097 = vadd.f32 0.0, %v2096
        %v2098 = vpop.f32.mrb[0].mxu0
        %v2099 = vadd.f32 0.0, %v2098
        %v2100 = vpop.f32.mrb[0].mxu0
        %v2101 = vadd.f32 0.0, %v2100
        %2102 = vmatprep.mubr.bf16.mxu0 0
        %2103 = vmatmul.mubr.bf16.gmra.mrb[0].mxu0 %v1903
        %v2104 = vpop.f32.mrb[0].mxu0
        %v2105 = vadd.f32 0.0, %v2104
        %v2106 = vpop.f32.mrb[0].mxu0
        %v2107 = vadd.f32 0.0, %v2106
        %v2108 = vpop.f32.mrb[0].mxu0
        %v2109 = vadd.f32 0.0, %v2108
        %v2110 = vpop.f32.mrb[0].mxu0
        %v2111 = vadd.f32 0.0, %v2110
        %2112 = vdwg.mxu0
        %v2113 = vadd.f32 %v1864, %v2035
        %v2114 = vadd.f32 %v1865, %v2037
        %v2115 = vadd.f32 %v1866, %v2039
        %v2116 = vadd.f32 %v1867, %v2041
        %v2117 = vadd.f32 %v1868, %v2045
        %v2118 = vadd.f32 %v1869, %v2047
        %v2119 = vadd.f32 %v1870, %v2049
        %v2120 = vadd.f32 %v1871, %v2051
        %v2121 = vadd.f32 %v1872, %v2055
        %v2122 = vadd.f32 %v1873, %v2057
        %v2123 = vadd.f32 %v1874, %v2059
        %v2124 = vadd.f32 %v1875, %v2061
        %v2125 = vadd.f32 %v1876, %v2065
        %v2126 = vadd.f32 %v1877, %v2067
        %v2127 = vadd.f32 %v1878, %v2069
        %v2128 = vadd.f32 %v1879, %v2071
        %v2129 = vadd.f32 %v1880, %v2075
        %v2130 = vadd.f32 %v1881, %v2077
        %v2131 = vadd.f32 %v1882, %v2079
        %v2132 = vadd.f32 %v1883, %v2081
        %v2133 = vadd.f32 %v1884, %v2085
        %v2134 = vadd.f32 %v1885, %v2087
        %v2135 = vadd.f32 %v1886, %v2089
        %v2136 = vadd.f32 %v1887, %v2091
        %v2137 = vadd.f32 %v1888, %v2095
        %v2138 = vadd.f32 %v1889, %v2097
        %v2139 = vadd.f32 %v1890, %v2099
        %v2140 = vadd.f32 %v1891, %v2101
        %v2141 = vadd.f32 %v1892, %v2105
        %v2142 = vadd.f32 %v1893, %v2107
        %v2143 = vadd.f32 %v1894, %v2109
        %v2144 = vadd.f32 %v1895, %v2111
        %2145 = vst [vmem:[%s1863] sm:$0xff] %v2113
        %2146 = vst [vmem:[%s1863 + $0x8] sm:$0xff] %v2114
        %2147 = vst [vmem:[%s1863 + $0x10] sm:$0xff] %v2115
        %2148 = vst [vmem:[%s1863 + $0x18] sm:$0xff] %v2116
        %2149 = vst [vmem:[%s1863 + $0x20] sm:$0xff] %v2117
        %2150 = vst [vmem:[%s1863 + $0x28] sm:$0xff] %v2118
        %2151 = vst [vmem:[%s1863 + $0x30] sm:$0xff] %v2119
        %2152 = vst [vmem:[%s1863 + $0x38] sm:$0xff] %v2120
        %2153 = vst [vmem:[%s1863 + $0x40] sm:$0xff] %v2121
        %2154 = vst [vmem:[%s1863 + $0x48] sm:$0xff] %v2122
        %2155 = vst [vmem:[%s1863 + $0x50] sm:$0xff] %v2123
        %2156 = vst [vmem:[%s1863 + $0x58] sm:$0xff] %v2124
        %2157 = vst [vmem:[%s1863 + $0x60] sm:$0xff] %v2125
        %2158 = vst [vmem:[%s1863 + $0x68] sm:$0xff] %v2126
        %2159 = vst [vmem:[%s1863 + $0x70] sm:$0xff] %v2127
        %2160 = vst [vmem:[%s1863 + $0x78] sm:$0xff] %v2128
        %2161 = vst [vmem:[%s1863 + $0x80] sm:$0xff] %v2129
        %2162 = vst [vmem:[%s1863 + $0x88] sm:$0xff] %v2130
        %2163 = vst [vmem:[%s1863 + $0x90] sm:$0xff] %v2131
        %2164 = vst [vmem:[%s1863 + $0x98] sm:$0xff] %v2132
        %2165 = vst [vmem:[%s1863 + $0xa0] sm:$0xff] %v2133
        %2166 = vst [vmem:[%s1863 + $0xa8] sm:$0xff] %v2134
        %2167 = vst [vmem:[%s1863 + $0xb0] sm:$0xff] %v2135
        %2168 = vst [vmem:[%s1863 + $0xb8] sm:$0xff] %v2136
        %2169 = vst [vmem:[%s1863 + $0xc0] sm:$0xff] %v2137
        %2170 = vst [vmem:[%s1863 + $0xc8] sm:$0xff] %v2138
        %2171 = vst [vmem:[%s1863 + $0xd0] sm:$0xff] %v2139
        %2172 = vst [vmem:[%s1863 + $0xd8] sm:$0xff] %v2140
        %2173 = vst [vmem:[%s1863 + $0xe0] sm:$0xff] %v2141
        %2174 = vst [vmem:[%s1863 + $0xe8] sm:$0xff] %v2142
        %2175 = vst [vmem:[%s1863 + $0xf0] sm:$0xff] %v2143
        %2176 = vst [vmem:[%s1863 + $0xf8] sm:$0xff] %v2144
        %p2177 = scmp.eq.s32.totalorder %s30, 1
        %p2178 = scmp.eq.s32.totalorder %s31, 1
        %p2179 = pnand %p2177, %p2178
        %p2180 = pneg %p2179
        // Predicated region
        $region57: #{tpu_custom_call.1} parent=35 // pred_check
          _
        $region58: #{tpu_custom_call.1} parent=35 // pred_check_branch
          %2182 = sbr.rel (%p2179) target = $region60
        $region59: #{tpu_custom_call.1} parent=35 // pred_region
          %v2183 = vld [vmem:[#allocation5] sm:$0xff]
          %v2184 = vld [vmem:[#allocation5 + $0x8] sm:$0xff]
          %v2185 = vld [vmem:[#allocation5 + $0x10] sm:$0xff]
          %v2186 = vld [vmem:[#allocation5 + $0x18] sm:$0xff]
          %v2187 = vld [vmem:[#allocation5 + $0x20] sm:$0xff]
          %v2188 = vld [vmem:[#allocation5 + $0x28] sm:$0xff]
          %v2189 = vld [vmem:[#allocation5 + $0x30] sm:$0xff]
          %v2190 = vld [vmem:[#allocation5 + $0x38] sm:$0xff]
          %v2191 = vld [vmem:[#allocation5 + $0x40] sm:$0xff]
          %v2192 = vld [vmem:[#allocation5 + $0x48] sm:$0xff]
          %v2193 = vld [vmem:[#allocation5 + $0x50] sm:$0xff]
          %v2194 = vld [vmem:[#allocation5 + $0x58] sm:$0xff]
          %v2195 = vld [vmem:[#allocation5 + $0x60] sm:$0xff]
          %v2196 = vld [vmem:[#allocation5 + $0x68] sm:$0xff]
          %v2197 = vld [vmem:[#allocation5 + $0x70] sm:$0xff]
          %v2198 = vld [vmem:[#allocation5 + $0x78] sm:$0xff]
          %v2199 = vld [vmem:[#allocation5 + $0x80] sm:$0xff]
          %v2200 = vld [vmem:[#allocation5 + $0x88] sm:$0xff]
          %v2201 = vld [vmem:[#allocation5 + $0x90] sm:$0xff]
          %v2202 = vld [vmem:[#allocation5 + $0x98] sm:$0xff]
          %v2203 = vld [vmem:[#allocation5 + $0xa0] sm:$0xff]
          %v2204 = vld [vmem:[#allocation5 + $0xa8] sm:$0xff]
          %v2205 = vld [vmem:[#allocation5 + $0xb0] sm:$0xff]
          %v2206 = vld [vmem:[#allocation5 + $0xb8] sm:$0xff]
          %v2207 = vld [vmem:[#allocation5 + $0xc0] sm:$0xff]
          %v2208 = vld [vmem:[#allocation5 + $0xc8] sm:$0xff]
          %v2209 = vld [vmem:[#allocation5 + $0xd0] sm:$0xff]
          %v2210 = vld [vmem:[#allocation5 + $0xd8] sm:$0xff]
          %v2211 = vld [vmem:[#allocation5 + $0xe0] sm:$0xff]
          %v2212 = vld [vmem:[#allocation5 + $0xe8] sm:$0xff]
          %v2213 = vld [vmem:[#allocation5 + $0xf0] sm:$0xff]
          %v2214 = vld [vmem:[#allocation5 + $0xf8] sm:$0xff]
          %v2215 = vld [vmem:[#allocation5 + $0x100] sm:$0xff]
          %v2216 = vld [vmem:[#allocation5 + $0x108] sm:$0xff]
          %v2217 = vld [vmem:[#allocation5 + $0x110] sm:$0xff]
          %v2218 = vld [vmem:[#allocation5 + $0x118] sm:$0xff]
          %v2219 = vld [vmem:[#allocation5 + $0x120] sm:$0xff]
          %v2220 = vld [vmem:[#allocation5 + $0x128] sm:$0xff]
          %v2221 = vld [vmem:[#allocation5 + $0x130] sm:$0xff]
          %v2222 = vld [vmem:[#allocation5 + $0x138] sm:$0xff]
          %v2223 = vld [vmem:[#allocation5 + $0x140] sm:$0xff]
          %v2224 = vld [vmem:[#allocation5 + $0x148] sm:$0xff]
          %v2225 = vld [vmem:[#allocation5 + $0x150] sm:$0xff]
          %v2226 = vld [vmem:[#allocation5 + $0x158] sm:$0xff]
          %v2227 = vld [vmem:[#allocation5 + $0x160] sm:$0xff]
          %v2228 = vld [vmem:[#allocation5 + $0x168] sm:$0xff]
          %v2229 = vld [vmem:[#allocation5 + $0x170] sm:$0xff]
          %v2230 = vld [vmem:[#allocation5 + $0x178] sm:$0xff]
          %v2231 = vld [vmem:[#allocation5 + $0x180] sm:$0xff]
          %v2232 = vld [vmem:[#allocation5 + $0x188] sm:$0xff]
          %v2233 = vld [vmem:[#allocation5 + $0x190] sm:$0xff]
          %v2234 = vld [vmem:[#allocation5 + $0x198] sm:$0xff]
          %v2235 = vld [vmem:[#allocation5 + $0x1a0] sm:$0xff]
          %v2236 = vld [vmem:[#allocation5 + $0x1a8] sm:$0xff]
          %v2237 = vld [vmem:[#allocation5 + $0x1b0] sm:$0xff]
          %v2238 = vld [vmem:[#allocation5 + $0x1b8] sm:$0xff]
          %v2239 = vld [vmem:[#allocation5 + $0x1c0] sm:$0xff]
          %v2240 = vld [vmem:[#allocation5 + $0x1c8] sm:$0xff]
          %v2241 = vld [vmem:[#allocation5 + $0x1d0] sm:$0xff]
          %v2242 = vld [vmem:[#allocation5 + $0x1d8] sm:$0xff]
          %v2243 = vld [vmem:[#allocation5 + $0x1e0] sm:$0xff]
          %v2244 = vld [vmem:[#allocation5 + $0x1e8] sm:$0xff]
          %v2245 = vld [vmem:[#allocation5 + $0x1f0] sm:$0xff]
          %v2246 = vld [vmem:[#allocation5 + $0x1f8] sm:$0xff]
          %v2247 = vld [vmem:[%s3] sm:$0x3]
          %v2249 = vlaneseq
          %v2250 = vshrl.u32 %v2249, 7
          %v2251 = vsub.s32 0, %v2250
          %v2252 = vrot.slane %v2247, %v2251
          %v2253 = vlaneseq
          %v2254 = vshrl.u32 %v2253, 7
          %v2255 = vsub.s32 1, %v2254
          %v2256 = vrot.slane %v2247, %v2255
          %v2259 = vadd.f32 %v2183, %v2252
          %v2260 = vadd.f32 %v2184, %v2256
          %v2261 = vadd.f32 %v2185, %v2252
          %v2262 = vadd.f32 %v2186, %v2256
          %v2263 = vadd.f32 %v2187, %v2252
          %v2264 = vadd.f32 %v2188, %v2256
          %v2265 = vadd.f32 %v2189, %v2252
          %v2266 = vadd.f32 %v2190, %v2256
          %v2267 = vadd.f32 %v2191, %v2252
          %v2268 = vadd.f32 %v2192, %v2256
          %v2269 = vadd.f32 %v2193, %v2252
          %v2270 = vadd.f32 %v2194, %v2256
          %v2271 = vadd.f32 %v2195, %v2252
          %v2272 = vadd.f32 %v2196, %v2256
          %v2273 = vadd.f32 %v2197, %v2252
          %v2274 = vadd.f32 %v2198, %v2256
          %v2275 = vadd.f32 %v2199, %v2252
          %v2276 = vadd.f32 %v2200, %v2256
          %v2277 = vadd.f32 %v2201, %v2252
          %v2278 = vadd.f32 %v2202, %v2256
          %v2279 = vadd.f32 %v2203, %v2252
          %v2280 = vadd.f32 %v2204, %v2256
          %v2281 = vadd.f32 %v2205, %v2252
          %v2282 = vadd.f32 %v2206, %v2256
          %v2283 = vadd.f32 %v2207, %v2252
          %v2284 = vadd.f32 %v2208, %v2256
          %v2285 = vadd.f32 %v2209, %v2252
          %v2286 = vadd.f32 %v2210, %v2256
          %v2287 = vadd.f32 %v2211, %v2252
          %v2288 = vadd.f32 %v2212, %v2256
          %v2289 = vadd.f32 %v2213, %v2252
          %v2290 = vadd.f32 %v2214, %v2256
          %v2291 = vadd.f32 %v2215, %v2252
          %v2292 = vadd.f32 %v2216, %v2256
          %v2293 = vadd.f32 %v2217, %v2252
          %v2294 = vadd.f32 %v2218, %v2256
          %v2295 = vadd.f32 %v2219, %v2252
          %v2296 = vadd.f32 %v2220, %v2256
          %v2297 = vadd.f32 %v2221, %v2252
          %v2298 = vadd.f32 %v2222, %v2256
          %v2299 = vadd.f32 %v2223, %v2252
          %v2300 = vadd.f32 %v2224, %v2256
          %v2301 = vadd.f32 %v2225, %v2252
          %v2302 = vadd.f32 %v2226, %v2256
          %v2303 = vadd.f32 %v2227, %v2252
          %v2304 = vadd.f32 %v2228, %v2256
          %v2305 = vadd.f32 %v2229, %v2252
          %v2306 = vadd.f32 %v2230, %v2256
          %v2307 = vadd.f32 %v2231, %v2252
          %v2308 = vadd.f32 %v2232, %v2256
          %v2309 = vadd.f32 %v2233, %v2252
          %v2310 = vadd.f32 %v2234, %v2256
          %v2311 = vadd.f32 %v2235, %v2252
          %v2312 = vadd.f32 %v2236, %v2256
          %v2313 = vadd.f32 %v2237, %v2252
          %v2314 = vadd.f32 %v2238, %v2256
          %v2315 = vadd.f32 %v2239, %v2252
          %v2316 = vadd.f32 %v2240, %v2256
          %v2317 = vadd.f32 %v2241, %v2252
          %v2318 = vadd.f32 %v2242, %v2256
          %v2319 = vadd.f32 %v2243, %v2252
          %v2320 = vadd.f32 %v2244, %v2256
          %v2321 = vadd.f32 %v2245, %v2252
          %v2322 = vadd.f32 %v2246, %v2256
          %2323 = vst [vmem:[%s311] sm:$0xff] %v2259
          %2324 = vst [vmem:[%s311 + $0x8] sm:$0xff] %v2260
          %2325 = vst [vmem:[%s311 + $0x10] sm:$0xff] %v2261
          %2326 = vst [vmem:[%s311 + $0x18] sm:$0xff] %v2262
          %2327 = vst [vmem:[%s311 + $0x20] sm:$0xff] %v2263
          %2328 = vst [vmem:[%s311 + $0x28] sm:$0xff] %v2264
          %2329 = vst [vmem:[%s311 + $0x30] sm:$0xff] %v2265
          %2330 = vst [vmem:[%s311 + $0x38] sm:$0xff] %v2266
          %2331 = vst [vmem:[%s311 + $0x40] sm:$0xff] %v2267
          %2332 = vst [vmem:[%s311 + $0x48] sm:$0xff] %v2268
          %2333 = vst [vmem:[%s311 + $0x50] sm:$0xff] %v2269
          %2334 = vst [vmem:[%s311 + $0x58] sm:$0xff] %v2270
          %2335 = vst [vmem:[%s311 + $0x60] sm:$0xff] %v2271
          %2336 = vst [vmem:[%s311 + $0x68] sm:$0xff] %v2272
          %2337 = vst [vmem:[%s311 + $0x70] sm:$0xff] %v2273
          %2338 = vst [vmem:[%s311 + $0x78] sm:$0xff] %v2274
          %2339 = vst [vmem:[%s311 + $0x80] sm:$0xff] %v2275
          %2340 = vst [vmem:[%s311 + $0x88] sm:$0xff] %v2276
          %2341 = vst [vmem:[%s311 + $0x90] sm:$0xff] %v2277
          %2342 = vst [vmem:[%s311 + $0x98] sm:$0xff] %v2278
          %2343 = vst [vmem:[%s311 + $0xa0] sm:$0xff] %v2279
          %2344 = vst [vmem:[%s311 + $0xa8] sm:$0xff] %v2280
          %2345 = vst [vmem:[%s311 + $0xb0] sm:$0xff] %v2281
          %2346 = vst [vmem:[%s311 + $0xb8] sm:$0xff] %v2282
          %2347 = vst [vmem:[%s311 + $0xc0] sm:$0xff] %v2283
          %2348 = vst [vmem:[%s311 + $0xc8] sm:$0xff] %v2284
          %2349 = vst [vmem:[%s311 + $0xd0] sm:$0xff] %v2285
          %2350 = vst [vmem:[%s311 + $0xd8] sm:$0xff] %v2286
          %2351 = vst [vmem:[%s311 + $0xe0] sm:$0xff] %v2287
          %2352 = vst [vmem:[%s311 + $0xe8] sm:$0xff] %v2288
          %2353 = vst [vmem:[%s311 + $0xf0] sm:$0xff] %v2289
          %2354 = vst [vmem:[%s311 + $0xf8] sm:$0xff] %v2290
          %2355 = vst [vmem:[%s311 + $0x100] sm:$0xff] %v2291
          %2356 = vst [vmem:[%s311 + $0x108] sm:$0xff] %v2292
          %2357 = vst [vmem:[%s311 + $0x110] sm:$0xff] %v2293
          %2358 = vst [vmem:[%s311 + $0x118] sm:$0xff] %v2294
          %2359 = vst [vmem:[%s311 + $0x120] sm:$0xff] %v2295
          %2360 = vst [vmem:[%s311 + $0x128] sm:$0xff] %v2296
          %2361 = vst [vmem:[%s311 + $0x130] sm:$0xff] %v2297
          %2362 = vst [vmem:[%s311 + $0x138] sm:$0xff] %v2298
          %2363 = vst [vmem:[%s311 + $0x140] sm:$0xff] %v2299
          %2364 = vst [vmem:[%s311 + $0x148] sm:$0xff] %v2300
          %2365 = vst [vmem:[%s311 + $0x150] sm:$0xff] %v2301
          %2366 = vst [vmem:[%s311 + $0x158] sm:$0xff] %v2302
          %2367 = vst [vmem:[%s311 + $0x160] sm:$0xff] %v2303
          %2368 = vst [vmem:[%s311 + $0x168] sm:$0xff] %v2304
          %2369 = vst [vmem:[%s311 + $0x170] sm:$0xff] %v2305
          %2370 = vst [vmem:[%s311 + $0x178] sm:$0xff] %v2306
          %2371 = vst [vmem:[%s311 + $0x180] sm:$0xff] %v2307
          %2372 = vst [vmem:[%s311 + $0x188] sm:$0xff] %v2308
          %2373 = vst [vmem:[%s311 + $0x190] sm:$0xff] %v2309
          %2374 = vst [vmem:[%s311 + $0x198] sm:$0xff] %v2310
          %2375 = vst [vmem:[%s311 + $0x1a0] sm:$0xff] %v2311
          %2376 = vst [vmem:[%s311 + $0x1a8] sm:$0xff] %v2312
          %2377 = vst [vmem:[%s311 + $0x1b0] sm:$0xff] %v2313
          %2378 = vst [vmem:[%s311 + $0x1b8] sm:$0xff] %v2314
          %2379 = vst [vmem:[%s311 + $0x1c0] sm:$0xff] %v2315
          %2380 = vst [vmem:[%s311 + $0x1c8] sm:$0xff] %v2316
          %2381 = vst [vmem:[%s311 + $0x1d0] sm:$0xff] %v2317
          %2382 = vst [vmem:[%s311 + $0x1d8] sm:$0xff] %v2318
          %2383 = vst [vmem:[%s311 + $0x1e0] sm:$0xff] %v2319
          %2384 = vst [vmem:[%s311 + $0x1e8] sm:$0xff] %v2320
          %2385 = vst [vmem:[%s311 + $0x1f0] sm:$0xff] %v2321
          %2386 = vst [vmem:[%s311 + $0x1f8] sm:$0xff] %v2322
        $region60: #{tpu_custom_call.1} parent=35 // pred_fallthru
          _
        %s2387 = sand.u32 %s150, 1
        %s2388 = scalar_lea.sflag [#allocation8], %s2387
        %s2389 = sand.u32 %s150, 1
        %s2390 = smul.addr %s2389, 512
        %s2391 = scalar_lea.vmem [#allocation12], %s2390
        // Predicated region
        $region61: #{tpu_custom_call.1} parent=35 // pred_check
          %p2392 = pneg %p160
        $region62: #{tpu_custom_call.1} parent=35 // pred_check_branch
          %2394 = sbr.rel (%p2392) target = $region64
        $region63: #{tpu_custom_call.1} parent=35 // pred_region
          %s2396 = ssub.s32 8192, 8192
          %2397 = vsyncadd %s2388, %s2396
          %s2398 = smul.addr %s29, 64
          %s2399 = smul.addr %s2398, 128
          %s2400 = scalar_lea.hbm %s4, %s2399
          %s2401 = sshll.u32 %s2391, 4
          %s2402 = int_to_ptr.vmem [resolvable:$true] %s2401
          %2407 = dma.vmem_to_hbm [thread:$0]  %s2402, 8192, %s2400, %s2388, 256, 256, 16
        $region64: #{tpu_custom_call.1} parent=35 // pred_fallthru
          _
      $region36: #{tpu_custom_call.1} parent=5 // pred_fallthru
        _
      %p2408 = scmp.le.s32.totalorder 2, %s19
      // Predicated region
      $region65: #{tpu_custom_call.1} parent=5 // pred_check
        %p2409 = pneg %p2408
      $region66: #{tpu_custom_call.1} parent=5 // pred_check_branch
        %2411 = sbr.rel (%p2409) target = $region68
      $region67: #{tpu_custom_call.1} parent=5 // pred_region
        %s2412 = ssub.s32 %s19, 2
        // Predicated region
        $region69: #{tpu_custom_call.1} parent=67 // pred_check
          %p2413 = pneg %p166
        $region70: #{tpu_custom_call.1} parent=67 // pred_check_branch
          %2415 = sbr.rel (%p2413) target = $region72
        $region71: #{tpu_custom_call.1} parent=67 // pred_region
          %s2416 = sand.u32 %s151, 1
          %s2417 = scalar_lea.sflag [#allocation8], %s2416
          %s2418 = sand.u32 %s151, 1
          %s2419 = smul.addr %s2418, 512
          %s2420 = scalar_lea.vmem [#allocation12], %s2419
          %2421 = dma.done %s2417, 8192
        $region72: #{tpu_custom_call.1} parent=67 // pred_fallthru
          _
      $region68: #{tpu_custom_call.1} parent=5 // pred_fallthru
        _
    $region6: #{tpu_custom_call.1} parent=1 // loop_footer
      %s23 = sadd.s32 1, %s19
    $region7: #{tpu_custom_call.1} parent=1 // loop_footer_branch
      %18 = sbr.rel target = $region3
    $region8: #{tpu_custom_call.1} parent=1 // loop_exit
      _
    %2422 = vsyncpa [#allocation7], 1
    %s2423 = scalar_lea.sflag [#allocation7], 1
    %2424 = vsyncpa %s2423, 1
    %2425 = vsyncpa [#allocation10], 1
    %s2426 = scalar_lea.sflag [#allocation10], 1
    %2427 = vsyncpa %s2426, 1
    %2428 = vsyncpa [#allocation8], 1
    %s2429 = scalar_lea.sflag [#allocation8], 1
    %2430 = vsyncpa %s2429, 1

</llo_original>
